<compile_context>
chip_gen: v5e
topology: v5e:2x2
jax: 0.10.0
libtpu: 0.0.40
codegen_flags: <defaults>
</compile_context>

<pallas_src>
import functools

import jax
import jax.numpy as jnp
from jax.experimental import pallas as pl
from jax.experimental.pallas import tpu as pltpu


def _lstm_decoder_kernel(x_ref,
                         wih0_ref, whh0_ref, b0_ref,
                         wih1_ref, whh1_ref, b1_ref,
                         wd_ref, bd_ref,
                         out_ref,
                         xp_ref, h0_ref, c0_ref, h1_ref, c1_ref,
                         *, t_chunk, unroll):
    Bt, H = x_ref.shape
    O_pad = wd_ref.shape[1]
    chunk = pl.program_id(1)          # sequence-chunk index ("arbitrary" -> serial)

    # New batch tile: reset recurrent state and precompute the layer-0 input
    # projection once -- `features` is repeated across the whole sequence, so
    # x @ W_ih0 + (b_ih0 + b_hh0) is loop invariant.
    @pl.when(chunk == 0)
    def _():
        xp_ref[...] = (jnp.dot(x_ref[...].astype(jnp.bfloat16), wih0_ref[...],
                               preferred_element_type=jnp.float32)
                       + b0_ref[...])
        h0_ref[...] = jnp.zeros_like(h0_ref)
        c0_ref[...] = jnp.zeros_like(c0_ref)
        h1_ref[...] = jnp.zeros_like(h1_ref)
        c1_ref[...] = jnp.zeros_like(c1_ref)

    # Loop-invariant loads / broadcasts hoisted out of the time loop.
    xp = xp_ref[...]                       # (Bt, 4H) f32: x @ W_ih0 + b0
    whh0 = whh0_ref[...]                   # (H, 4H) bf16
    wih1 = wih1_ref[...]                   # (H, 4H) bf16
    whh1 = whh1_ref[...]                   # (H, 4H) bf16
    wd = wd_ref[...]                       # (H, O_pad) bf16
    b1 = jnp.broadcast_to(b1_ref[...], (Bt, 4 * H))      # f32
    bd = jnp.broadcast_to(bd_ref[...], (Bt, O_pad))      # f32

    def sigmoid(v):
        # 1 EUP op (tanh) instead of exp + reciprocal.
        return 0.5 * (jnp.tanh(0.5 * v) + 1.0)

    def gates_to_hc(gates, c_prev):
        # PyTorch gate order: [i | f | g | o].  Elementwise math stays in f32
        # (v5e has no bf16 VPU/EUP path).  NOTE: H=32 gate slices are
        # sub-lane; production H=256 is lane-aligned and free.
        i = sigmoid(gates[:, 0 * H:1 * H])
        f = sigmoid(gates[:, 1 * H:2 * H])
        g = jnp.tanh(gates[:, 2 * H:3 * H])
        o = sigmoid(gates[:, 3 * H:4 * H])
        c_new = f * c_prev + i * g
        return o * jnp.tanh(c_new), c_new

    def step(t, carry):
        h0, c0, h1, c1 = carry
        # Layer 0: only the recurrent matmul per step (input term precomputed).
        g0 = xp + jnp.dot(h0.astype(jnp.bfloat16), whh0,
                          preferred_element_type=jnp.float32)
        h0, c0 = gates_to_hc(g0, c0)
        # Layer 1: two accumulated MXU pushes (no lane-dim concat on the
        # serial chain).
        g1 = (jnp.dot(h0.astype(jnp.bfloat16), wih1,
                      preferred_element_type=jnp.float32)
              + jnp.dot(h1.astype(jnp.bfloat16), whh1,
                        preferred_element_type=jnp.float32)
              + b1)
        h1, c1 = gates_to_hc(g1, c1)
        # Dense head: lane-dense (O padded to 128) store; not on the recurrent
        # dependency chain, so it overlaps the next step's matmuls.
        y = jnp.dot(h1.astype(jnp.bfloat16), wd,
                    preferred_element_type=jnp.float32) + bd
        out_ref[t] = y.astype(out_ref.dtype)
        return (h0, c0, h1, c1)

    carry = (h0_ref[...], c0_ref[...], h1_ref[...], c1_ref[...])
    h0, c0, h1, c1 = jax.lax.fori_loop(0, t_chunk, step, carry, unroll=unroll)
    h0_ref[...] = h0
    c0_ref[...] = c0
    h1_ref[...] = h1
    c1_ref[...] = c1


def lstm_decoder_forward(features, params, *, seqlen, t_chunk=None, b_tile=None):
    """features: (B, H) float32.  Returns (B, seqlen, output_dim) float32."""
    B, H = features.shape
    O = params["wd_t"].shape[1]
    O_pad = max(128, ((O + 127) // 128) * 128)   # lane-dense output stores

    # Moderate chunking (num_chunks >= 2 where possible) so output writeback
    # pipelines against the next chunk's recurrence; partial unroll keeps LLO
    # visibility without exploding vreg pressure.
    if t_chunk is None:
        cands = [d for d in range(1, seqlen + 1)
                 if seqlen % d == 0 and d <= 32 and seqlen // d >= 2]
        t_chunk = max(cands) if cands else seqlen
    assert seqlen % t_chunk == 0, "t_chunk must divide seqlen"
    num_chunks = seqlen // t_chunk
    unroll = min(t_chunk, 8)

    if b_tile is None:
        b_tile = B if B <= 128 else 128
    assert B % b_tile == 0 and (b_tile == B or b_tile % 8 == 0), (
        "b_tile must be the full batch or a multiple of 8 (sublane tiling)")
    nb = B // b_tile

    # Zero-pad the dense head to O_pad lanes (padding sliced off below).
    wd_pad = jnp.pad(params["wd_t"], ((0, 0), (0, O_pad - O)))   # (H, O_pad) bf16
    bd_pad = jnp.pad(params["bd"], ((0, 0), (0, O_pad - O)))     # (1, O_pad) f32

    kernel = functools.partial(_lstm_decoder_kernel, t_chunk=t_chunk, unroll=unroll)
    rep = lambda shape: pl.BlockSpec(shape, lambda b, c: (0,) * len(shape))

    cost = pl.CostEstimate(
        flops=int(B * seqlen * (24 * H * H + 2 * H * O_pad) + 8 * B * H * H),
        transcendentals=int(B * seqlen * 10 * H),
        bytes_accessed=int(B * H * 4 + 4 * (H * 4 * H) * 2 + H * O_pad * 2
                           + (8 * H + O_pad) * 4 + seqlen * B * O_pad * 4),
    )

    # Kernel writes time-major (seqlen, B, O_pad); transpose + slice back to
    # (B, seqlen, O) outside the kernel (cheap XLA ops).
    out_pad = pl.pallas_call(
        kernel,
        out_shape=jax.ShapeDtypeStruct((seqlen, B, O_pad), jnp.float32),
        grid_spec=pltpu.PrefetchScalarGridSpec(
            num_scalar_prefetch=0,
            grid=(nb, num_chunks),            # (batch tiles, sequence chunks)
            in_specs=[
                pl.BlockSpec((b_tile, H), lambda b, c: (b, 0)),   # features
                rep((H, 4 * H)),        # W_ih0^T   (bf16)
                rep((H, 4 * H)),        # W_hh0^T   (bf16)
                rep((1, 4 * H)),        # b_ih0 + b_hh0 (f32)
                rep((H, 4 * H)),        # W_ih1^T   (bf16)
                rep((H, 4 * H)),        # W_hh1^T   (bf16)
                rep((1, 4 * H)),        # b_ih1 + b_hh1 (f32)
                rep((H, O_pad)),        # dense weight^T (bf16, lane-padded)
                rep((1, O_pad)),        # dense bias (f32, lane-padded)
            ],
            out_specs=pl.BlockSpec((t_chunk, b_tile, O_pad), lambda b, c: (c, b, 0)),
            scratch_shapes=[
                pltpu.VMEM((b_tile, 4 * H), jnp.float32),   # x @ W_ih0 + b0
                pltpu.VMEM((b_tile, H), jnp.float32),       # h layer 0
                pltpu.VMEM((b_tile, H), jnp.float32),       # c layer 0
                pltpu.VMEM((b_tile, H), jnp.float32),       # h layer 1
                pltpu.VMEM((b_tile, H), jnp.float32),       # c layer 1
            ],
        ),
        compiler_params=pltpu.CompilerParams(
            # batch tiles are independent (v7x megacore); the sequence axis
            # carries h/c state and must stay serial.
            dimension_semantics=("parallel", "arbitrary"),
        ),
        cost_estimate=cost,
    )(features,
      params["wih0_t"], params["whh0_t"], params["b0"],
      params["wih1_t"], params["whh1_t"], params["b1"],
      wd_pad, bd_pad)

    return jnp.transpose(out_pad, (1, 0, 2))[:, :, :O]   # (B, seqlen, O)


def make_params(key, input_dim, output_dim):
    """Deterministic init mimicking PyTorch's U(-1/sqrt(H), 1/sqrt(H)).

    Weights are stored in bf16 (native MXU input dtype); biases stay f32.
    """
    H, O = input_dim, output_dim
    bound = 1.0 / jnp.sqrt(jnp.float32(H))
    ks = jax.random.split(key, 10)
    u = lambda k, shape: jax.random.uniform(k, shape, jnp.float32, -bound, bound)
    bf = jnp.bfloat16

    # PyTorch stores weight_ih_l{k}: (4H, in), weight_hh_l{k}: (4H, H).
    wih0 = u(ks[0], (4 * H, H)); whh0 = u(ks[1], (4 * H, H))
    bih0 = u(ks[2], (4 * H,));   bhh0 = u(ks[3], (4 * H,))
    wih1 = u(ks[4], (4 * H, H)); whh1 = u(ks[5], (4 * H, H))
    bih1 = u(ks[6], (4 * H,));   bhh1 = u(ks[7], (4 * H,))
    wd = u(ks[8], (O, H));       bd = u(ks[9], (O,))

    return {
        "wih0_t": wih0.T.astype(bf), "whh0_t": whh0.T.astype(bf),
        "b0": (bih0 + bhh0)[None, :],
        "wih1_t": wih1.T.astype(bf), "whh1_t": whh1.T.astype(bf),
        "b1": (bih1 + bhh1)[None, :],
        "wd_t": wd.T.astype(bf), "bd": bd[None, :],
    }


def reference_forward(features, params, *, seqlen):
    """Pure-JAX reference (lax.scan) matching PyTorch LSTM semantics, using
    the same bf16-weight / f32-accumulate strategy as the kernel."""
    B, H = features.shape
    bf = jnp.bfloat16

    def cell(x, h, c, wih_t, whh_t, b):
        gates = (jnp.dot(x.astype(bf), wih_t, preferred_element_type=jnp.float32)
                 + jnp.dot(h.astype(bf), whh_t, preferred_element_type=jnp.float32)
                 + b)
        i = jax.nn.sigmoid(gates[:, 0 * H:1 * H])
        f = jax.nn.sigmoid(gates[:, 1 * H:2 * H])
        g = jnp.tanh(gates[:, 2 * H:3 * H])
        o = jax.nn.sigmoid(gates[:, 3 * H:4 * H])
        c_new = f * c + i * g
        return o * jnp.tanh(c_new), c_new

    def step(carry, _):
        h0, c0, h1, c1 = carry
        h0, c0 = cell(features, h0, c0, params["wih0_t"], params["whh0_t"], params["b0"])
        h1, c1 = cell(h0, h1, c1, params["wih1_t"], params["whh1_t"], params["b1"])
        y = (jnp.dot(h1.astype(bf), params["wd_t"],
                     preferred_element_type=jnp.float32) + params["bd"])
        return (h0, c0, h1, c1), y

    init = tuple(jnp.zeros((B, H), jnp.float32) for _ in range(4))
    _, ys = jax.lax.scan(step, init, None, length=seqlen)
    return jnp.transpose(ys, (1, 0, 2))  # (B, seqlen, O)


if __name__ == "__main__":
    # Small, forward-consistent shapes: features (B, input_dim), hidden = input_dim.
    B, INPUT_DIM, OUTPUT_DIM, SEQLEN = 2, 32, 16, 8

    key = jax.random.PRNGKey(0)
    k_feat, k_param = jax.random.split(key)
    features = jax.random.normal(k_feat, (B, INPUT_DIM), dtype=jnp.float32)
    params = make_params(k_param, INPUT_DIM, OUTPUT_DIM)

    fwd = jax.jit(functools.partial(lstm_decoder_forward, seqlen=SEQLEN))
    out = jax.block_until_ready(fwd(features, params))

    ref = reference_forward(features, params, seqlen=SEQLEN)
    assert out.shape == (B, SEQLEN, OUTPUT_DIM)
    assert jnp.allclose(out, ref, atol=2e-3, rtol=2e-3), (
        float(jnp.max(jnp.abs(out - ref))))

    print("KERNEL_OK")
</pallas_src>

<mosaic_0001>
module attributes {stable_mosaic.version = 11 : i64} {
  func.func @_lstm_decoder_kernel(%arg0: i32, %arg1: i32, %arg2: memref<2x32xf32, #tpu.memory_space<vmem>>, %arg3: memref<32x128xbf16, #tpu.memory_space<vmem>>, %arg4: memref<32x128xbf16, #tpu.memory_space<vmem>>, %arg5: memref<1x128xf32, #tpu.memory_space<vmem>>, %arg6: memref<32x128xbf16, #tpu.memory_space<vmem>>, %arg7: memref<32x128xbf16, #tpu.memory_space<vmem>>, %arg8: memref<1x128xf32, #tpu.memory_space<vmem>>, %arg9: memref<32x128xbf16, #tpu.memory_space<vmem>>, %arg10: memref<1x128xf32, #tpu.memory_space<vmem>>, %arg11: memref<4x2x128xf32, #tpu.memory_space<vmem>>, %arg12: memref<2x128xf32, #tpu.memory_space<vmem>>, %arg13: memref<2x32xf32, #tpu.memory_space<vmem>>, %arg14: memref<2x32xf32, #tpu.memory_space<vmem>>, %arg15: memref<2x32xf32, #tpu.memory_space<vmem>>, %arg16: memref<2x32xf32, #tpu.memory_space<vmem>>) attributes {dimension_semantics = [#tpu.dimension_semantics<parallel>, #tpu.dimension_semantics<arbitrary>], iteration_bounds = array<i64: 1, 2>, scalar_prefetch = 0 : i64, scratch_operands = 5 : i64, tpu.core_type = #tpu.core_type<tc>, window_params = [{transform_indices = @transform_0, window_bounds = array<i64: 2, 32>}, {pipeline_mode = #tpu.pipeline_mode<synchronous>, transform_indices = @transform_1, window_bounds = array<i64: 32, 128>}, {pipeline_mode = #tpu.pipeline_mode<synchronous>, transform_indices = @transform_2, window_bounds = array<i64: 32, 128>}, {pipeline_mode = #tpu.pipeline_mode<synchronous>, transform_indices = @transform_3, window_bounds = array<i64: 1, 128>}, {pipeline_mode = #tpu.pipeline_mode<synchronous>, transform_indices = @transform_4, window_bounds = array<i64: 32, 128>}, {pipeline_mode = #tpu.pipeline_mode<synchronous>, transform_indices = @transform_5, window_bounds = array<i64: 32, 128>}, {pipeline_mode = #tpu.pipeline_mode<synchronous>, transform_indices = @transform_6, window_bounds = array<i64: 1, 128>}, {pipeline_mode = #tpu.pipeline_mode<synchronous>, transform_indices = @transform_7, window_bounds = array<i64: 32, 128>}, {pipeline_mode = #tpu.pipeline_mode<synchronous>, transform_indices = @transform_8, window_bounds = array<i64: 1, 128>}, {transform_indices = @transform_9, window_bounds = array<i64: 4, 2, 128>}]} {
    %c0_i32 = arith.constant 0 : i32
    %0 = arith.cmpi eq, %arg1, %c0_i32 : i32
    %1 = arith.extui %0 : i1 to i32
    %c0_i32_0 = arith.constant 0 : i32
    %2 = arith.cmpi ne, %1, %c0_i32_0 : i32
    scf.if %2 {
      %c0_126 = arith.constant 0 : index
      %c0_127 = arith.constant 0 : index
      %334 = vector.load %arg2[%c0_126, %c0_127] : memref<2x32xf32, #tpu.memory_space<vmem>>, vector<2x32xf32>
      %335 = arith.truncf %334 : vector<2x32xf32> to vector<2x32xbf16>
      %c0_128 = arith.constant 0 : index
      %c0_129 = arith.constant 0 : index
      %336 = vector.load %arg3[%c0_128, %c0_129] : memref<32x128xbf16, #tpu.memory_space<vmem>>, vector<32x128xbf16>
      %cst_130 = arith.constant dense<0.000000e+00> : vector<2x128xf32>
      %337 = tpu.matmul %335, %336, %cst_130 {dimension_numbers = #tpu.dot_dimension_numbers<[1], [0], [0], [1], [0, 0, 1, 1], [], []>} : vector<2x32xbf16>, vector<32x128xbf16>, vector<2x128xf32> -> vector<2x128xf32>
      %c0_131 = arith.constant 0 : index
      %c0_132 = arith.constant 0 : index
      %338 = vector.load %arg5[%c0_131, %c0_132] : memref<1x128xf32, #tpu.memory_space<vmem>>, vector<1x128xf32>
      %339 = vector.broadcast %338 : vector<1x128xf32> to vector<2x128xf32>
      %340 = arith.addf %337, %339 : vector<2x128xf32>
      %c0_133 = arith.constant 0 : index
      %c0_134 = arith.constant 0 : index
      %341 = vector.load %arg12[%c0_133, %c0_134] : memref<2x128xf32, #tpu.memory_space<vmem>>, vector<2x128xf32>
      tpu.vector_store %arg12[%c0_133, %c0_134], %340 {strides = array<i32>} : memref<2x128xf32, #tpu.memory_space<vmem>>, vector<2x128xf32>,
      %cst_135 = arith.constant 0.000000e+00 : f32
      %342 = vector.broadcast %cst_135 : f32 to vector<2x32xf32>
      %c0_136 = arith.constant 0 : index
      %c0_137 = arith.constant 0 : index
      %343 = vector.load %arg13[%c0_136, %c0_137] : memref<2x32xf32, #tpu.memory_space<vmem>>, vector<2x32xf32>
      tpu.vector_store %arg13[%c0_136, %c0_137], %342 {strides = array<i32>} : memref<2x32xf32, #tpu.memory_space<vmem>>, vector<2x32xf32>,
      %cst_138 = arith.constant 0.000000e+00 : f32
      %344 = vector.broadcast %cst_138 : f32 to vector<2x32xf32>
      %c0_139 = arith.constant 0 : index
      %c0_140 = arith.constant 0 : index
      %345 = vector.load %arg14[%c0_139, %c0_140] : memref<2x32xf32, #tpu.memory_space<vmem>>, vector<2x32xf32>
      tpu.vector_store %arg14[%c0_139, %c0_140], %344 {strides = array<i32>} : memref<2x32xf32, #tpu.memory_space<vmem>>, vector<2x32xf32>,
      %cst_141 = arith.constant 0.000000e+00 : f32
      %346 = vector.broadcast %cst_141 : f32 to vector<2x32xf32>
      %c0_142 = arith.constant 0 : index
      %c0_143 = arith.constant 0 : index
      %347 = vector.load %arg15[%c0_142, %c0_143] : memref<2x32xf32, #tpu.memory_space<vmem>>, vector<2x32xf32>
      tpu.vector_store %arg15[%c0_142, %c0_143], %346 {strides = array<i32>} : memref<2x32xf32, #tpu.memory_space<vmem>>, vector<2x32xf32>,
      %cst_144 = arith.constant 0.000000e+00 : f32
      %348 = vector.broadcast %cst_144 : f32 to vector<2x32xf32>
      %c0_145 = arith.constant 0 : index
      %c0_146 = arith.constant 0 : index
      %349 = vector.load %arg16[%c0_145, %c0_146] : memref<2x32xf32, #tpu.memory_space<vmem>>, vector<2x32xf32>
      tpu.vector_store %arg16[%c0_145, %c0_146], %348 {strides = array<i32>} : memref<2x32xf32, #tpu.memory_space<vmem>>, vector<2x32xf32>,
    } else {
    }
    %c0 = arith.constant 0 : index
    %c0_1 = arith.constant 0 : index
    %3 = vector.load %arg12[%c0, %c0_1] : memref<2x128xf32, #tpu.memory_space<vmem>>, vector<2x128xf32>
    %c0_2 = arith.constant 0 : index
    %c0_3 = arith.constant 0 : index
    %4 = vector.load %arg4[%c0_2, %c0_3] : memref<32x128xbf16, #tpu.memory_space<vmem>>, vector<32x128xbf16>
    %c0_4 = arith.constant 0 : index
    %c0_5 = arith.constant 0 : index
    %5 = vector.load %arg6[%c0_4, %c0_5] : memref<32x128xbf16, #tpu.memory_space<vmem>>, vector<32x128xbf16>
    %c0_6 = arith.constant 0 : index
    %c0_7 = arith.constant 0 : index
    %6 = vector.load %arg7[%c0_6, %c0_7] : memref<32x128xbf16, #tpu.memory_space<vmem>>, vector<32x128xbf16>
    %c0_8 = arith.constant 0 : index
    %c0_9 = arith.constant 0 : index
    %7 = vector.load %arg9[%c0_8, %c0_9] : memref<32x128xbf16, #tpu.memory_space<vmem>>, vector<32x128xbf16>
    %c0_10 = arith.constant 0 : index
    %c0_11 = arith.constant 0 : index
    %8 = vector.load %arg8[%c0_10, %c0_11] : memref<1x128xf32, #tpu.memory_space<vmem>>, vector<1x128xf32>
    %9 = vector.shape_cast %8 : vector<1x128xf32> to vector<1x128xf32>
    %10 = vector.broadcast %9 : vector<1x128xf32> to vector<2x128xf32>
    %c0_12 = arith.constant 0 : index
    %c0_13 = arith.constant 0 : index
    %11 = vector.load %arg10[%c0_12, %c0_13] : memref<1x128xf32, #tpu.memory_space<vmem>>, vector<1x128xf32>
    %12 = vector.shape_cast %11 : vector<1x128xf32> to vector<1x128xf32>
    %13 = vector.broadcast %12 : vector<1x128xf32> to vector<2x128xf32>
    %c0_14 = arith.constant 0 : index
    %c0_15 = arith.constant 0 : index
    %14 = vector.load %arg13[%c0_14, %c0_15] : memref<2x32xf32, #tpu.memory_space<vmem>>, vector<2x32xf32>
    %c0_16 = arith.constant 0 : index
    %c0_17 = arith.constant 0 : index
    %15 = vector.load %arg14[%c0_16, %c0_17] : memref<2x32xf32, #tpu.memory_space<vmem>>, vector<2x32xf32>
    %c0_18 = arith.constant 0 : index
    %c0_19 = arith.constant 0 : index
    %16 = vector.load %arg15[%c0_18, %c0_19] : memref<2x32xf32, #tpu.memory_space<vmem>>, vector<2x32xf32>
    %c0_20 = arith.constant 0 : index
    %c0_21 = arith.constant 0 : index
    %17 = vector.load %arg16[%c0_20, %c0_21] : memref<2x32xf32, #tpu.memory_space<vmem>>, vector<2x32xf32>
    %c0_i32_22 = arith.constant 0 : i32
    %18 = arith.truncf %14 : vector<2x32xf32> to vector<2x32xbf16>
    %cst = arith.constant dense<0.000000e+00> : vector<2x128xf32>
    %19 = tpu.matmul %18, %4, %cst {dimension_numbers = #tpu.dot_dimension_numbers<[1], [0], [0], [1], [0, 0, 1, 1], [], []>} : vector<2x32xbf16>, vector<32x128xbf16>, vector<2x128xf32> -> vector<2x128xf32>
    %20 = arith.addf %3, %19 : vector<2x128xf32>
    %21 = vector.extract_strided_slice %20 {offsets = [0, 0], sizes = [2, 32], strides = [1, 1]} : vector<2x128xf32> to vector<2x32xf32>
    %cst_23 = arith.constant 5.000000e-01 : f32
    %22 = vector.broadcast %cst_23 : f32 to vector<2x32xf32>
    %23 = arith.mulf %22, %21 : vector<2x32xf32>
    %24 = math.tanh %23 : vector<2x32xf32>
    %cst_24 = arith.constant 1.000000e+00 : f32
    %25 = vector.broadcast %cst_24 : f32 to vector<2x32xf32>
    %26 = arith.addf %24, %25 : vector<2x32xf32>
    %cst_25 = arith.constant 5.000000e-01 : f32
    %27 = vector.broadcast %cst_25 : f32 to vector<2x32xf32>
    %28 = arith.mulf %27, %26 : vector<2x32xf32>
    %29 = vector.extract_strided_slice %20 {offsets = [0, 32], sizes = [2, 32], strides = [1, 1]} : vector<2x128xf32> to vector<2x32xf32>
    %cst_26 = arith.constant 5.000000e-01 : f32
    %30 = vector.broadcast %cst_26 : f32 to vector<2x32xf32>
    %31 = arith.mulf %30, %29 : vector<2x32xf32>
    %32 = math.tanh %31 : vector<2x32xf32>
    %cst_27 = arith.constant 1.000000e+00 : f32
    %33 = vector.broadcast %cst_27 : f32 to vector<2x32xf32>
    %34 = arith.addf %32, %33 : vector<2x32xf32>
    %cst_28 = arith.constant 5.000000e-01 : f32
    %35 = vector.broadcast %cst_28 : f32 to vector<2x32xf32>
    %36 = arith.mulf %35, %34 : vector<2x32xf32>
    %37 = vector.extract_strided_slice %20 {offsets = [0, 64], sizes = [2, 32], strides = [1, 1]} : vector<2x128xf32> to vector<2x32xf32>
    %38 = math.tanh %37 : vector<2x32xf32>
    %39 = vector.extract_strided_slice %20 {offsets = [0, 96], sizes = [2, 32], strides = [1, 1]} : vector<2x128xf32> to vector<2x32xf32>
    %cst_29 = arith.constant 5.000000e-01 : f32
    %40 = vector.broadcast %cst_29 : f32 to vector<2x32xf32>
    %41 = arith.mulf %40, %39 : vector<2x32xf32>
    %42 = math.tanh %41 : vector<2x32xf32>
    %cst_30 = arith.constant 1.000000e+00 : f32
    %43 = vector.broadcast %cst_30 : f32 to vector<2x32xf32>
    %44 = arith.addf %42, %43 : vector<2x32xf32>
    %cst_31 = arith.constant 5.000000e-01 : f32
    %45 = vector.broadcast %cst_31 : f32 to vector<2x32xf32>
    %46 = arith.mulf %45, %44 : vector<2x32xf32>
    %47 = arith.mulf %36, %15 : vector<2x32xf32>
    %48 = arith.mulf %28, %38 : vector<2x32xf32>
    %49 = arith.addf %47, %48 : vector<2x32xf32>
    %50 = math.tanh %49 : vector<2x32xf32>
    %51 = arith.mulf %46, %50 : vector<2x32xf32>
    %52 = arith.truncf %51 : vector<2x32xf32> to vector<2x32xbf16>
    %cst_32 = arith.constant dense<0.000000e+00> : vector<2x128xf32>
    %53 = tpu.matmul %52, %5, %cst_32 {dimension_numbers = #tpu.dot_dimension_numbers<[1], [0], [0], [1], [0, 0, 1, 1], [], []>} : vector<2x32xbf16>, vector<32x128xbf16>, vector<2x128xf32> -> vector<2x128xf32>
    %54 = arith.truncf %16 : vector<2x32xf32> to vector<2x32xbf16>
    %cst_33 = arith.constant dense<0.000000e+00> : vector<2x128xf32>
    %55 = tpu.matmul %54, %6, %cst_33 {dimension_numbers = #tpu.dot_dimension_numbers<[1], [0], [0], [1], [0, 0, 1, 1], [], []>} : vector<2x32xbf16>, vector<32x128xbf16>, vector<2x128xf32> -> vector<2x128xf32>
    %56 = arith.addf %53, %55 : vector<2x128xf32>
    %57 = arith.addf %56, %10 : vector<2x128xf32>
    %58 = vector.extract_strided_slice %57 {offsets = [0, 0], sizes = [2, 32], strides = [1, 1]} : vector<2x128xf32> to vector<2x32xf32>
    %cst_34 = arith.constant 5.000000e-01 : f32
    %59 = vector.broadcast %cst_34 : f32 to vector<2x32xf32>
    %60 = arith.mulf %59, %58 : vector<2x32xf32>
    %61 = math.tanh %60 : vector<2x32xf32>
    %cst_35 = arith.constant 1.000000e+00 : f32
    %62 = vector.broadcast %cst_35 : f32 to vector<2x32xf32>
    %63 = arith.addf %61, %62 : vector<2x32xf32>
    %cst_36 = arith.constant 5.000000e-01 : f32
    %64 = vector.broadcast %cst_36 : f32 to vector<2x32xf32>
    %65 = arith.mulf %64, %63 : vector<2x32xf32>
    %66 = vector.extract_strided_slice %57 {offsets = [0, 32], sizes = [2, 32], strides = [1, 1]} : vector<2x128xf32> to vector<2x32xf32>
    %cst_37 = arith.constant 5.000000e-01 : f32
    %67 = vector.broadcast %cst_37 : f32 to vector<2x32xf32>
    %68 = arith.mulf %67, %66 : vector<2x32xf32>
    %69 = math.tanh %68 : vector<2x32xf32>
    %cst_38 = arith.constant 1.000000e+00 : f32
    %70 = vector.broadcast %cst_38 : f32 to vector<2x32xf32>
    %71 = arith.addf %69, %70 : vector<2x32xf32>
    %cst_39 = arith.constant 5.000000e-01 : f32
    %72 = vector.broadcast %cst_39 : f32 to vector<2x32xf32>
    %73 = arith.mulf %72, %71 : vector<2x32xf32>
    %74 = vector.extract_strided_slice %57 {offsets = [0, 64], sizes = [2, 32], strides = [1, 1]} : vector<2x128xf32> to vector<2x32xf32>
    %75 = math.tanh %74 : vector<2x32xf32>
    %76 = vector.extract_strided_slice %57 {offsets = [0, 96], sizes = [2, 32], strides = [1, 1]} : vector<2x128xf32> to vector<2x32xf32>
    %cst_40 = arith.constant 5.000000e-01 : f32
    %77 = vector.broadcast %cst_40 : f32 to vector<2x32xf32>
    %78 = arith.mulf %77, %76 : vector<2x32xf32>
    %79 = math.tanh %78 : vector<2x32xf32>
    %cst_41 = arith.constant 1.000000e+00 : f32
    %80 = vector.broadcast %cst_41 : f32 to vector<2x32xf32>
    %81 = arith.addf %79, %80 : vector<2x32xf32>
    %cst_42 = arith.constant 5.000000e-01 : f32
    %82 = vector.broadcast %cst_42 : f32 to vector<2x32xf32>
    %83 = arith.mulf %82, %81 : vector<2x32xf32>
    %84 = arith.mulf %73, %17 : vector<2x32xf32>
    %85 = arith.mulf %65, %75 : vector<2x32xf32>
    %86 = arith.addf %84, %85 : vector<2x32xf32>
    %87 = math.tanh %86 : vector<2x32xf32>
    %88 = arith.mulf %83, %87 : vector<2x32xf32>
    %89 = arith.truncf %88 : vector<2x32xf32> to vector<2x32xbf16>
    %cst_43 = arith.constant dense<0.000000e+00> : vector<2x128xf32>
    %90 = tpu.matmul %89, %7, %cst_43 {dimension_numbers = #tpu.dot_dimension_numbers<[1], [0], [0], [1], [0, 0, 1, 1], [], []>} : vector<2x32xbf16>, vector<32x128xbf16>, vector<2x128xf32> -> vector<2x128xf32>
    %91 = arith.addf %90, %13 : vector<2x128xf32>
    %92 = arith.index_cast %c0_i32_22 : i32 to index
    %c0_44 = arith.constant 0 : index
    %c0_45 = arith.constant 0 : index
    %93 = vector.load %arg11[%92, %c0_44, %c0_45] : memref<4x2x128xf32, #tpu.memory_space<vmem>>, vector<1x2x128xf32>
    %94 = vector.shape_cast %93 : vector<1x2x128xf32> to vector<2x128xf32>
    %95 = vector.shape_cast %91 : vector<2x128xf32> to vector<1x2x128xf32>
    tpu.vector_store %arg11[%92, %c0_44, %c0_45], %95 {strides = array<i32>} : memref<4x2x128xf32, #tpu.memory_space<vmem>>, vector<1x2x128xf32>,
    %c1_i32 = arith.constant 1 : i32
    %96 = arith.truncf %51 : vector<2x32xf32> to vector<2x32xbf16>
    %cst_46 = arith.constant dense<0.000000e+00> : vector<2x128xf32>
    %97 = tpu.matmul %96, %4, %cst_46 {dimension_numbers = #tpu.dot_dimension_numbers<[1], [0], [0], [1], [0, 0, 1, 1], [], []>} : vector<2x32xbf16>, vector<32x128xbf16>, vector<2x128xf32> -> vector<2x128xf32>
    %98 = arith.addf %3, %97 : vector<2x128xf32>
    %99 = vector.extract_strided_slice %98 {offsets = [0, 0], sizes = [2, 32], strides = [1, 1]} : vector<2x128xf32> to vector<2x32xf32>
    %cst_47 = arith.constant 5.000000e-01 : f32
    %100 = vector.broadcast %cst_47 : f32 to vector<2x32xf32>
    %101 = arith.mulf %100, %99 : vector<2x32xf32>
    %102 = math.tanh %101 : vector<2x32xf32>
    %cst_48 = arith.constant 1.000000e+00 : f32
    %103 = vector.broadcast %cst_48 : f32 to vector<2x32xf32>
    %104 = arith.addf %102, %103 : vector<2x32xf32>
    %cst_49 = arith.constant 5.000000e-01 : f32
    %105 = vector.broadcast %cst_49 : f32 to vector<2x32xf32>
    %106 = arith.mulf %105, %104 : vector<2x32xf32>
    %107 = vector.extract_strided_slice %98 {offsets = [0, 32], sizes = [2, 32], strides = [1, 1]} : vector<2x128xf32> to vector<2x32xf32>
    %cst_50 = arith.constant 5.000000e-01 : f32
    %108 = vector.broadcast %cst_50 : f32 to vector<2x32xf32>
    %109 = arith.mulf %108, %107 : vector<2x32xf32>
    %110 = math.tanh %109 : vector<2x32xf32>
    %cst_51 = arith.constant 1.000000e+00 : f32
    %111 = vector.broadcast %cst_51 : f32 to vector<2x32xf32>
    %112 = arith.addf %110, %111 : vector<2x32xf32>
    %cst_52 = arith.constant 5.000000e-01 : f32
    %113 = vector.broadcast %cst_52 : f32 to vector<2x32xf32>
    %114 = arith.mulf %113, %112 : vector<2x32xf32>
    %115 = vector.extract_strided_slice %98 {offsets = [0, 64], sizes = [2, 32], strides = [1, 1]} : vector<2x128xf32> to vector<2x32xf32>
    %116 = math.tanh %115 : vector<2x32xf32>
    %117 = vector.extract_strided_slice %98 {offsets = [0, 96], sizes = [2, 32], strides = [1, 1]} : vector<2x128xf32> to vector<2x32xf32>
    %cst_53 = arith.constant 5.000000e-01 : f32
    %118 = vector.broadcast %cst_53 : f32 to vector<2x32xf32>
    %119 = arith.mulf %118, %117 : vector<2x32xf32>
    %120 = math.tanh %119 : vector<2x32xf32>
    %cst_54 = arith.constant 1.000000e+00 : f32
    %121 = vector.broadcast %cst_54 : f32 to vector<2x32xf32>
    %122 = arith.addf %120, %121 : vector<2x32xf32>
    %cst_55 = arith.constant 5.000000e-01 : f32
    %123 = vector.broadcast %cst_55 : f32 to vector<2x32xf32>
    %124 = arith.mulf %123, %122 : vector<2x32xf32>
    %125 = arith.mulf %114, %49 : vector<2x32xf32>
    %126 = arith.mulf %106, %116 : vector<2x32xf32>
    %127 = arith.addf %125, %126 : vector<2x32xf32>
    %128 = math.tanh %127 : vector<2x32xf32>
    %129 = arith.mulf %124, %128 : vector<2x32xf32>
    %130 = arith.truncf %129 : vector<2x32xf32> to vector<2x32xbf16>
    %cst_56 = arith.constant dense<0.000000e+00> : vector<2x128xf32>
    %131 = tpu.matmul %130, %5, %cst_56 {dimension_numbers = #tpu.dot_dimension_numbers<[1], [0], [0], [1], [0, 0, 1, 1], [], []>} : vector<2x32xbf16>, vector<32x128xbf16>, vector<2x128xf32> -> vector<2x128xf32>
    %132 = arith.truncf %88 : vector<2x32xf32> to vector<2x32xbf16>
    %cst_57 = arith.constant dense<0.000000e+00> : vector<2x128xf32>
    %133 = tpu.matmul %132, %6, %cst_57 {dimension_numbers = #tpu.dot_dimension_numbers<[1], [0], [0], [1], [0, 0, 1, 1], [], []>} : vector<2x32xbf16>, vector<32x128xbf16>, vector<2x128xf32> -> vector<2x128xf32>
    %134 = arith.addf %131, %133 : vector<2x128xf32>
    %135 = arith.addf %134, %10 : vector<2x128xf32>
    %136 = vector.extract_strided_slice %135 {offsets = [0, 0], sizes = [2, 32], strides = [1, 1]} : vector<2x128xf32> to vector<2x32xf32>
    %cst_58 = arith.constant 5.000000e-01 : f32
    %137 = vector.broadcast %cst_58 : f32 to vector<2x32xf32>
    %138 = arith.mulf %137, %136 : vector<2x32xf32>
    %139 = math.tanh %138 : vector<2x32xf32>
    %cst_59 = arith.constant 1.000000e+00 : f32
    %140 = vector.broadcast %cst_59 : f32 to vector<2x32xf32>
    %141 = arith.addf %139, %140 : vector<2x32xf32>
    %cst_60 = arith.constant 5.000000e-01 : f32
    %142 = vector.broadcast %cst_60 : f32 to vector<2x32xf32>
    %143 = arith.mulf %142, %141 : vector<2x32xf32>
    %144 = vector.extract_strided_slice %135 {offsets = [0, 32], sizes = [2, 32], strides = [1, 1]} : vector<2x128xf32> to vector<2x32xf32>
    %cst_61 = arith.constant 5.000000e-01 : f32
    %145 = vector.broadcast %cst_61 : f32 to vector<2x32xf32>
    %146 = arith.mulf %145, %144 : vector<2x32xf32>
    %147 = math.tanh %146 : vector<2x32xf32>
    %cst_62 = arith.constant 1.000000e+00 : f32
    %148 = vector.broadcast %cst_62 : f32 to vector<2x32xf32>
    %149 = arith.addf %147, %148 : vector<2x32xf32>
    %cst_63 = arith.constant 5.000000e-01 : f32
    %150 = vector.broadcast %cst_63 : f32 to vector<2x32xf32>
    %151 = arith.mulf %150, %149 : vector<2x32xf32>
    %152 = vector.extract_strided_slice %135 {offsets = [0, 64], sizes = [2, 32], strides = [1, 1]} : vector<2x128xf32> to vector<2x32xf32>
    %153 = math.tanh %152 : vector<2x32xf32>
    %154 = vector.extract_strided_slice %135 {offsets = [0, 96], sizes = [2, 32], strides = [1, 1]} : vector<2x128xf32> to vector<2x32xf32>
    %cst_64 = arith.constant 5.000000e-01 : f32
    %155 = vector.broadcast %cst_64 : f32 to vector<2x32xf32>
    %156 = arith.mulf %155, %154 : vector<2x32xf32>
    %157 = math.tanh %156 : vector<2x32xf32>
    %cst_65 = arith.constant 1.000000e+00 : f32
    %158 = vector.broadcast %cst_65 : f32 to vector<2x32xf32>
    %159 = arith.addf %157, %158 : vector<2x32xf32>
    %cst_66 = arith.constant 5.000000e-01 : f32
    %160 = vector.broadcast %cst_66 : f32 to vector<2x32xf32>
    %161 = arith.mulf %160, %159 : vector<2x32xf32>
    %162 = arith.mulf %151, %86 : vector<2x32xf32>
    %163 = arith.mulf %143, %153 : vector<2x32xf32>
    %164 = arith.addf %162, %163 : vector<2x32xf32>
    %165 = math.tanh %164 : vector<2x32xf32>
    %166 = arith.mulf %161, %165 : vector<2x32xf32>
    %167 = arith.truncf %166 : vector<2x32xf32> to vector<2x32xbf16>
    %cst_67 = arith.constant dense<0.000000e+00> : vector<2x128xf32>
    %168 = tpu.matmul %167, %7, %cst_67 {dimension_numbers = #tpu.dot_dimension_numbers<[1], [0], [0], [1], [0, 0, 1, 1], [], []>} : vector<2x32xbf16>, vector<32x128xbf16>, vector<2x128xf32> -> vector<2x128xf32>
    %169 = arith.addf %168, %13 : vector<2x128xf32>
    %170 = arith.index_cast %c1_i32 : i32 to index
    %c0_68 = arith.constant 0 : index
    %c0_69 = arith.constant 0 : index
    %171 = vector.load %arg11[%170, %c0_68, %c0_69] : memref<4x2x128xf32, #tpu.memory_space<vmem>>, vector<1x2x128xf32>
    %172 = vector.shape_cast %171 : vector<1x2x128xf32> to vector<2x128xf32>
    %173 = vector.shape_cast %169 : vector<2x128xf32> to vector<1x2x128xf32>
    tpu.vector_store %arg11[%170, %c0_68, %c0_69], %173 {strides = array<i32>} : memref<4x2x128xf32, #tpu.memory_space<vmem>>, vector<1x2x128xf32>,
    %c2_i32 = arith.constant 2 : i32
    %174 = arith.truncf %129 : vector<2x32xf32> to vector<2x32xbf16>
    %cst_70 = arith.constant dense<0.000000e+00> : vector<2x128xf32>
    %175 = tpu.matmul %174, %4, %cst_70 {dimension_numbers = #tpu.dot_dimension_numbers<[1], [0], [0], [1], [0, 0, 1, 1], [], []>} : vector<2x32xbf16>, vector<32x128xbf16>, vector<2x128xf32> -> vector<2x128xf32>
    %176 = arith.addf %3, %175 : vector<2x128xf32>
    %177 = vector.extract_strided_slice %176 {offsets = [0, 0], sizes = [2, 32], strides = [1, 1]} : vector<2x128xf32> to vector<2x32xf32>
    %cst_71 = arith.constant 5.000000e-01 : f32
    %178 = vector.broadcast %cst_71 : f32 to vector<2x32xf32>
    %179 = arith.mulf %178, %177 : vector<2x32xf32>
    %180 = math.tanh %179 : vector<2x32xf32>
    %cst_72 = arith.constant 1.000000e+00 : f32
    %181 = vector.broadcast %cst_72 : f32 to vector<2x32xf32>
    %182 = arith.addf %180, %181 : vector<2x32xf32>
    %cst_73 = arith.constant 5.000000e-01 : f32
    %183 = vector.broadcast %cst_73 : f32 to vector<2x32xf32>
    %184 = arith.mulf %183, %182 : vector<2x32xf32>
    %185 = vector.extract_strided_slice %176 {offsets = [0, 32], sizes = [2, 32], strides = [1, 1]} : vector<2x128xf32> to vector<2x32xf32>
    %cst_74 = arith.constant 5.000000e-01 : f32
    %186 = vector.broadcast %cst_74 : f32 to vector<2x32xf32>
    %187 = arith.mulf %186, %185 : vector<2x32xf32>
    %188 = math.tanh %187 : vector<2x32xf32>
    %cst_75 = arith.constant 1.000000e+00 : f32
    %189 = vector.broadcast %cst_75 : f32 to vector<2x32xf32>
    %190 = arith.addf %188, %189 : vector<2x32xf32>
    %cst_76 = arith.constant 5.000000e-01 : f32
    %191 = vector.broadcast %cst_76 : f32 to vector<2x32xf32>
    %192 = arith.mulf %191, %190 : vector<2x32xf32>
    %193 = vector.extract_strided_slice %176 {offsets = [0, 64], sizes = [2, 32], strides = [1, 1]} : vector<2x128xf32> to vector<2x32xf32>
    %194 = math.tanh %193 : vector<2x32xf32>
    %195 = vector.extract_strided_slice %176 {offsets = [0, 96], sizes = [2, 32], strides = [1, 1]} : vector<2x128xf32> to vector<2x32xf32>
    %cst_77 = arith.constant 5.000000e-01 : f32
    %196 = vector.broadcast %cst_77 : f32 to vector<2x32xf32>
    %197 = arith.mulf %196, %195 : vector<2x32xf32>
    %198 = math.tanh %197 : vector<2x32xf32>
    %cst_78 = arith.constant 1.000000e+00 : f32
    %199 = vector.broadcast %cst_78 : f32 to vector<2x32xf32>
    %200 = arith.addf %198, %199 : vector<2x32xf32>
    %cst_79 = arith.constant 5.000000e-01 : f32
    %201 = vector.broadcast %cst_79 : f32 to vector<2x32xf32>
    %202 = arith.mulf %201, %200 : vector<2x32xf32>
    %203 = arith.mulf %192, %127 : vector<2x32xf32>
    %204 = arith.mulf %184, %194 : vector<2x32xf32>
    %205 = arith.addf %203, %204 : vector<2x32xf32>
    %206 = math.tanh %205 : vector<2x32xf32>
    %207 = arith.mulf %202, %206 : vector<2x32xf32>
    %208 = arith.truncf %207 : vector<2x32xf32> to vector<2x32xbf16>
    %cst_80 = arith.constant dense<0.000000e+00> : vector<2x128xf32>
    %209 = tpu.matmul %208, %5, %cst_80 {dimension_numbers = #tpu.dot_dimension_numbers<[1], [0], [0], [1], [0, 0, 1, 1], [], []>} : vector<2x32xbf16>, vector<32x128xbf16>, vector<2x128xf32> -> vector<2x128xf32>
    %210 = arith.truncf %166 : vector<2x32xf32> to vector<2x32xbf16>
    %cst_81 = arith.constant dense<0.000000e+00> : vector<2x128xf32>
    %211 = tpu.matmul %210, %6, %cst_81 {dimension_numbers = #tpu.dot_dimension_numbers<[1], [0], [0], [1], [0, 0, 1, 1], [], []>} : vector<2x32xbf16>, vector<32x128xbf16>, vector<2x128xf32> -> vector<2x128xf32>
    %212 = arith.addf %209, %211 : vector<2x128xf32>
    %213 = arith.addf %212, %10 : vector<2x128xf32>
    %214 = vector.extract_strided_slice %213 {offsets = [0, 0], sizes = [2, 32], strides = [1, 1]} : vector<2x128xf32> to vector<2x32xf32>
    %cst_82 = arith.constant 5.000000e-01 : f32
    %215 = vector.broadcast %cst_82 : f32 to vector<2x32xf32>
    %216 = arith.mulf %215, %214 : vector<2x32xf32>
    %217 = math.tanh %216 : vector<2x32xf32>
    %cst_83 = arith.constant 1.000000e+00 : f32
    %218 = vector.broadcast %cst_83 : f32 to vector<2x32xf32>
    %219 = arith.addf %217, %218 : vector<2x32xf32>
    %cst_84 = arith.constant 5.000000e-01 : f32
    %220 = vector.broadcast %cst_84 : f32 to vector<2x32xf32>
    %221 = arith.mulf %220, %219 : vector<2x32xf32>
    %222 = vector.extract_strided_slice %213 {offsets = [0, 32], sizes = [2, 32], strides = [1, 1]} : vector<2x128xf32> to vector<2x32xf32>
    %cst_85 = arith.constant 5.000000e-01 : f32
    %223 = vector.broadcast %cst_85 : f32 to vector<2x32xf32>
    %224 = arith.mulf %223, %222 : vector<2x32xf32>
    %225 = math.tanh %224 : vector<2x32xf32>
    %cst_86 = arith.constant 1.000000e+00 : f32
    %226 = vector.broadcast %cst_86 : f32 to vector<2x32xf32>
    %227 = arith.addf %225, %226 : vector<2x32xf32>
    %cst_87 = arith.constant 5.000000e-01 : f32
    %228 = vector.broadcast %cst_87 : f32 to vector<2x32xf32>
    %229 = arith.mulf %228, %227 : vector<2x32xf32>
    %230 = vector.extract_strided_slice %213 {offsets = [0, 64], sizes = [2, 32], strides = [1, 1]} : vector<2x128xf32> to vector<2x32xf32>
    %231 = math.tanh %230 : vector<2x32xf32>
    %232 = vector.extract_strided_slice %213 {offsets = [0, 96], sizes = [2, 32], strides = [1, 1]} : vector<2x128xf32> to vector<2x32xf32>
    %cst_88 = arith.constant 5.000000e-01 : f32
    %233 = vector.broadcast %cst_88 : f32 to vector<2x32xf32>
    %234 = arith.mulf %233, %232 : vector<2x32xf32>
    %235 = math.tanh %234 : vector<2x32xf32>
    %cst_89 = arith.constant 1.000000e+00 : f32
    %236 = vector.broadcast %cst_89 : f32 to vector<2x32xf32>
    %237 = arith.addf %235, %236 : vector<2x32xf32>
    %cst_90 = arith.constant 5.000000e-01 : f32
    %238 = vector.broadcast %cst_90 : f32 to vector<2x32xf32>
    %239 = arith.mulf %238, %237 : vector<2x32xf32>
    %240 = arith.mulf %229, %164 : vector<2x32xf32>
    %241 = arith.mulf %221, %231 : vector<2x32xf32>
    %242 = arith.addf %240, %241 : vector<2x32xf32>
    %243 = math.tanh %242 : vector<2x32xf32>
    %244 = arith.mulf %239, %243 : vector<2x32xf32>
    %245 = arith.truncf %244 : vector<2x32xf32> to vector<2x32xbf16>
    %cst_91 = arith.constant dense<0.000000e+00> : vector<2x128xf32>
    %246 = tpu.matmul %245, %7, %cst_91 {dimension_numbers = #tpu.dot_dimension_numbers<[1], [0], [0], [1], [0, 0, 1, 1], [], []>} : vector<2x32xbf16>, vector<32x128xbf16>, vector<2x128xf32> -> vector<2x128xf32>
    %247 = arith.addf %246, %13 : vector<2x128xf32>
    %248 = arith.index_cast %c2_i32 : i32 to index
    %c0_92 = arith.constant 0 : index
    %c0_93 = arith.constant 0 : index
    %249 = vector.load %arg11[%248, %c0_92, %c0_93] : memref<4x2x128xf32, #tpu.memory_space<vmem>>, vector<1x2x128xf32>
    %250 = vector.shape_cast %249 : vector<1x2x128xf32> to vector<2x128xf32>
    %251 = vector.shape_cast %247 : vector<2x128xf32> to vector<1x2x128xf32>
    tpu.vector_store %arg11[%248, %c0_92, %c0_93], %251 {strides = array<i32>} : memref<4x2x128xf32, #tpu.memory_space<vmem>>, vector<1x2x128xf32>,
    %c3_i32 = arith.constant 3 : i32
    %252 = arith.truncf %207 : vector<2x32xf32> to vector<2x32xbf16>
    %cst_94 = arith.constant dense<0.000000e+00> : vector<2x128xf32>
    %253 = tpu.matmul %252, %4, %cst_94 {dimension_numbers = #tpu.dot_dimension_numbers<[1], [0], [0], [1], [0, 0, 1, 1], [], []>} : vector<2x32xbf16>, vector<32x128xbf16>, vector<2x128xf32> -> vector<2x128xf32>
    %254 = arith.addf %3, %253 : vector<2x128xf32>
    %255 = vector.extract_strided_slice %254 {offsets = [0, 0], sizes = [2, 32], strides = [1, 1]} : vector<2x128xf32> to vector<2x32xf32>
    %cst_95 = arith.constant 5.000000e-01 : f32
    %256 = vector.broadcast %cst_95 : f32 to vector<2x32xf32>
    %257 = arith.mulf %256, %255 : vector<2x32xf32>
    %258 = math.tanh %257 : vector<2x32xf32>
    %cst_96 = arith.constant 1.000000e+00 : f32
    %259 = vector.broadcast %cst_96 : f32 to vector<2x32xf32>
    %260 = arith.addf %258, %259 : vector<2x32xf32>
    %cst_97 = arith.constant 5.000000e-01 : f32
    %261 = vector.broadcast %cst_97 : f32 to vector<2x32xf32>
    %262 = arith.mulf %261, %260 : vector<2x32xf32>
    %263 = vector.extract_strided_slice %254 {offsets = [0, 32], sizes = [2, 32], strides = [1, 1]} : vector<2x128xf32> to vector<2x32xf32>
    %cst_98 = arith.constant 5.000000e-01 : f32
    %264 = vector.broadcast %cst_98 : f32 to vector<2x32xf32>
    %265 = arith.mulf %264, %263 : vector<2x32xf32>
    %266 = math.tanh %265 : vector<2x32xf32>
    %cst_99 = arith.constant 1.000000e+00 : f32
    %267 = vector.broadcast %cst_99 : f32 to vector<2x32xf32>
    %268 = arith.addf %266, %267 : vector<2x32xf32>
    %cst_100 = arith.constant 5.000000e-01 : f32
    %269 = vector.broadcast %cst_100 : f32 to vector<2x32xf32>
    %270 = arith.mulf %269, %268 : vector<2x32xf32>
    %271 = vector.extract_strided_slice %254 {offsets = [0, 64], sizes = [2, 32], strides = [1, 1]} : vector<2x128xf32> to vector<2x32xf32>
    %272 = math.tanh %271 : vector<2x32xf32>
    %273 = vector.extract_strided_slice %254 {offsets = [0, 96], sizes = [2, 32], strides = [1, 1]} : vector<2x128xf32> to vector<2x32xf32>
    %cst_101 = arith.constant 5.000000e-01 : f32
    %274 = vector.broadcast %cst_101 : f32 to vector<2x32xf32>
    %275 = arith.mulf %274, %273 : vector<2x32xf32>
    %276 = math.tanh %275 : vector<2x32xf32>
    %cst_102 = arith.constant 1.000000e+00 : f32
    %277 = vector.broadcast %cst_102 : f32 to vector<2x32xf32>
    %278 = arith.addf %276, %277 : vector<2x32xf32>
    %cst_103 = arith.constant 5.000000e-01 : f32
    %279 = vector.broadcast %cst_103 : f32 to vector<2x32xf32>
    %280 = arith.mulf %279, %278 : vector<2x32xf32>
    %281 = arith.mulf %270, %205 : vector<2x32xf32>
    %282 = arith.mulf %262, %272 : vector<2x32xf32>
    %283 = arith.addf %281, %282 : vector<2x32xf32>
    %284 = math.tanh %283 : vector<2x32xf32>
    %285 = arith.mulf %280, %284 : vector<2x32xf32>
    %286 = arith.truncf %285 : vector<2x32xf32> to vector<2x32xbf16>
    %cst_104 = arith.constant dense<0.000000e+00> : vector<2x128xf32>
    %287 = tpu.matmul %286, %5, %cst_104 {dimension_numbers = #tpu.dot_dimension_numbers<[1], [0], [0], [1], [0, 0, 1, 1], [], []>} : vector<2x32xbf16>, vector<32x128xbf16>, vector<2x128xf32> -> vector<2x128xf32>
    %288 = arith.truncf %244 : vector<2x32xf32> to vector<2x32xbf16>
    %cst_105 = arith.constant dense<0.000000e+00> : vector<2x128xf32>
    %289 = tpu.matmul %288, %6, %cst_105 {dimension_numbers = #tpu.dot_dimension_numbers<[1], [0], [0], [1], [0, 0, 1, 1], [], []>} : vector<2x32xbf16>, vector<32x128xbf16>, vector<2x128xf32> -> vector<2x128xf32>
    %290 = arith.addf %287, %289 : vector<2x128xf32>
    %291 = arith.addf %290, %10 : vector<2x128xf32>
    %292 = vector.extract_strided_slice %291 {offsets = [0, 0], sizes = [2, 32], strides = [1, 1]} : vector<2x128xf32> to vector<2x32xf32>
    %cst_106 = arith.constant 5.000000e-01 : f32
    %293 = vector.broadcast %cst_106 : f32 to vector<2x32xf32>
    %294 = arith.mulf %293, %292 : vector<2x32xf32>
    %295 = math.tanh %294 : vector<2x32xf32>
    %cst_107 = arith.constant 1.000000e+00 : f32
    %296 = vector.broadcast %cst_107 : f32 to vector<2x32xf32>
    %297 = arith.addf %295, %296 : vector<2x32xf32>
    %cst_108 = arith.constant 5.000000e-01 : f32
    %298 = vector.broadcast %cst_108 : f32 to vector<2x32xf32>
    %299 = arith.mulf %298, %297 : vector<2x32xf32>
    %300 = vector.extract_strided_slice %291 {offsets = [0, 32], sizes = [2, 32], strides = [1, 1]} : vector<2x128xf32> to vector<2x32xf32>
    %cst_109 = arith.constant 5.000000e-01 : f32
    %301 = vector.broadcast %cst_109 : f32 to vector<2x32xf32>
    %302 = arith.mulf %301, %300 : vector<2x32xf32>
    %303 = math.tanh %302 : vector<2x32xf32>
    %cst_110 = arith.constant 1.000000e+00 : f32
    %304 = vector.broadcast %cst_110 : f32 to vector<2x32xf32>
    %305 = arith.addf %303, %304 : vector<2x32xf32>
    %cst_111 = arith.constant 5.000000e-01 : f32
    %306 = vector.broadcast %cst_111 : f32 to vector<2x32xf32>
    %307 = arith.mulf %306, %305 : vector<2x32xf32>
    %308 = vector.extract_strided_slice %291 {offsets = [0, 64], sizes = [2, 32], strides = [1, 1]} : vector<2x128xf32> to vector<2x32xf32>
    %309 = math.tanh %308 : vector<2x32xf32>
    %310 = vector.extract_strided_slice %291 {offsets = [0, 96], sizes = [2, 32], strides = [1, 1]} : vector<2x128xf32> to vector<2x32xf32>
    %cst_112 = arith.constant 5.000000e-01 : f32
    %311 = vector.broadcast %cst_112 : f32 to vector<2x32xf32>
    %312 = arith.mulf %311, %310 : vector<2x32xf32>
    %313 = math.tanh %312 : vector<2x32xf32>
    %cst_113 = arith.constant 1.000000e+00 : f32
    %314 = vector.broadcast %cst_113 : f32 to vector<2x32xf32>
    %315 = arith.addf %313, %314 : vector<2x32xf32>
    %cst_114 = arith.constant 5.000000e-01 : f32
    %316 = vector.broadcast %cst_114 : f32 to vector<2x32xf32>
    %317 = arith.mulf %316, %315 : vector<2x32xf32>
    %318 = arith.mulf %307, %242 : vector<2x32xf32>
    %319 = arith.mulf %299, %309 : vector<2x32xf32>
    %320 = arith.addf %318, %319 : vector<2x32xf32>
    %321 = math.tanh %320 : vector<2x32xf32>
    %322 = arith.mulf %317, %321 : vector<2x32xf32>
    %323 = arith.truncf %322 : vector<2x32xf32> to vector<2x32xbf16>
    %cst_115 = arith.constant dense<0.000000e+00> : vector<2x128xf32>
    %324 = tpu.matmul %323, %7, %cst_115 {dimension_numbers = #tpu.dot_dimension_numbers<[1], [0], [0], [1], [0, 0, 1, 1], [], []>} : vector<2x32xbf16>, vector<32x128xbf16>, vector<2x128xf32> -> vector<2x128xf32>
    %325 = arith.addf %324, %13 : vector<2x128xf32>
    %326 = arith.index_cast %c3_i32 : i32 to index
    %c0_116 = arith.constant 0 : index
    %c0_117 = arith.constant 0 : index
    %327 = vector.load %arg11[%326, %c0_116, %c0_117] : memref<4x2x128xf32, #tpu.memory_space<vmem>>, vector<1x2x128xf32>
    %328 = vector.shape_cast %327 : vector<1x2x128xf32> to vector<2x128xf32>
    %329 = vector.shape_cast %325 : vector<2x128xf32> to vector<1x2x128xf32>
    tpu.vector_store %arg11[%326, %c0_116, %c0_117], %329 {strides = array<i32>} : memref<4x2x128xf32, #tpu.memory_space<vmem>>, vector<1x2x128xf32>,
    %c4_i32 = arith.constant 4 : i32
    %c0_118 = arith.constant 0 : index
    %c0_119 = arith.constant 0 : index
    %330 = vector.load %arg13[%c0_118, %c0_119] : memref<2x32xf32, #tpu.memory_space<vmem>>, vector<2x32xf32>
    tpu.vector_store %arg13[%c0_118, %c0_119], %285 {strides = array<i32>} : memref<2x32xf32, #tpu.memory_space<vmem>>, vector<2x32xf32>,
    %c0_120 = arith.constant 0 : index
    %c0_121 = arith.constant 0 : index
    %331 = vector.load %arg14[%c0_120, %c0_121] : memref<2x32xf32, #tpu.memory_space<vmem>>, vector<2x32xf32>
    tpu.vector_store %arg14[%c0_120, %c0_121], %283 {strides = array<i32>} : memref<2x32xf32, #tpu.memory_space<vmem>>, vector<2x32xf32>,
    %c0_122 = arith.constant 0 : index
    %c0_123 = arith.constant 0 : index
    %332 = vector.load %arg15[%c0_122, %c0_123] : memref<2x32xf32, #tpu.memory_space<vmem>>, vector<2x32xf32>
    tpu.vector_store %arg15[%c0_122, %c0_123], %322 {strides = array<i32>} : memref<2x32xf32, #tpu.memory_space<vmem>>, vector<2x32xf32>,
    %c0_124 = arith.constant 0 : index
    %c0_125 = arith.constant 0 : index
    %333 = vector.load %arg16[%c0_124, %c0_125] : memref<2x32xf32, #tpu.memory_space<vmem>>, vector<2x32xf32>
    tpu.vector_store %arg16[%c0_124, %c0_125], %320 {strides = array<i32>} : memref<2x32xf32, #tpu.memory_space<vmem>>, vector<2x32xf32>,
    return
  }
  func.func @transform_0(%arg0: i32, %arg1: i32) -> (i32, i32) {
    %c0_i32 = arith.constant 0 : i32
    %c0_i32_0 = arith.constant 0 : i32
    return %arg0, %c0_i32 : i32, i32
  }
  func.func @transform_1(%arg0: i32, %arg1: i32) -> (i32, i32) {
    %c0_i32 = arith.constant 0 : i32
    %c0_i32_0 = arith.constant 0 : i32
    %c0_i32_1 = arith.constant 0 : i32
    return %c0_i32, %c0_i32_0 : i32, i32
  }
  func.func @transform_2(%arg0: i32, %arg1: i32) -> (i32, i32) {
    %c0_i32 = arith.constant 0 : i32
    %c0_i32_0 = arith.constant 0 : i32
    %c0_i32_1 = arith.constant 0 : i32
    return %c0_i32, %c0_i32_0 : i32, i32
  }
  func.func @transform_3(%arg0: i32, %arg1: i32) -> (i32, i32) {
    %c0_i32 = arith.constant 0 : i32
    %c0_i32_0 = arith.constant 0 : i32
    %c0_i32_1 = arith.constant 0 : i32
    return %c0_i32, %c0_i32_0 : i32, i32
  }
  func.func @transform_4(%arg0: i32, %arg1: i32) -> (i32, i32) {
    %c0_i32 = arith.constant 0 : i32
    %c0_i32_0 = arith.constant 0 : i32
    %c0_i32_1 = arith.constant 0 : i32
    return %c0_i32, %c0_i32_0 : i32, i32
  }
  func.func @transform_5(%arg0: i32, %arg1: i32) -> (i32, i32) {
    %c0_i32 = arith.constant 0 : i32
    %c0_i32_0 = arith.constant 0 : i32
    %c0_i32_1 = arith.constant 0 : i32
    return %c0_i32, %c0_i32_0 : i32, i32
  }
  func.func @transform_6(%arg0: i32, %arg1: i32) -> (i32, i32) {
    %c0_i32 = arith.constant 0 : i32
    %c0_i32_0 = arith.constant 0 : i32
    %c0_i32_1 = arith.constant 0 : i32
    return %c0_i32, %c0_i32_0 : i32, i32
  }
  func.func @transform_7(%arg0: i32, %arg1: i32) -> (i32, i32) {
    %c0_i32 = arith.constant 0 : i32
    %c0_i32_0 = arith.constant 0 : i32
    %c0_i32_1 = arith.constant 0 : i32
    return %c0_i32, %c0_i32_0 : i32, i32
  }
  func.func @transform_8(%arg0: i32, %arg1: i32) -> (i32, i32) {
    %c0_i32 = arith.constant 0 : i32
    %c0_i32_0 = arith.constant 0 : i32
    %c0_i32_1 = arith.constant 0 : i32
    return %c0_i32, %c0_i32_0 : i32, i32
  }
  func.func @transform_9(%arg0: i32, %arg1: i32) -> (i32, i32, i32) {
    %c0_i32 = arith.constant 0 : i32
    %c0_i32_0 = arith.constant 0 : i32
    return %arg1, %arg0, %c0_i32 : i32, i32, i32
  }
}

</mosaic_0001>

<llo_original>
// kernel: lstm_decoder_forward.1
$region0: #{lstm_decoder_forward.1}
  #allocation0 [shape = 'u32[]', space=smem, size = 0x4, offset = 0x4, fixed_abs, tag = 'smem constant byte address 0x4 - core index']
  #allocation1 [shape = 'u32[72,128]{1,0:T(1,128)}', space=vmem, size = 0x9000, scoped, tag = 'internal scratch']
  #allocation2 [shape = 'f32[2,128]{1,0:T(2,128)}', space=vmem, size = 0x400, scoped, tag = 'scratch operand']
  #allocation3 [shape = 'f32[2,32]{1,0:T(2,128)}', space=vmem, size = 0x400, scoped, tag = 'scratch operand']
  #allocation4 [shape = 'f32[2,32]{1,0:T(2,128)}', space=vmem, size = 0x400, scoped, tag = 'scratch operand']
  #allocation5 [shape = 'f32[2,32]{1,0:T(2,128)}', space=vmem, size = 0x400, scoped, tag = 'scratch operand']
  #allocation6 [shape = 'f32[2,32]{1,0:T(2,128)}', space=vmem, size = 0x400, scoped, tag = 'scratch operand']
  %s0 = inlined_call_operand.hbm [shape: f32[2,32], index: 0, kind: input, shape index: {}]
  %s1 = inlined_call_operand.vmem [shape: bf16[32,128], index: 1, kind: input, shape index: {}]
  %s2 = inlined_call_operand.vmem [shape: bf16[32,128], index: 2, kind: input, shape index: {}]
  %s3 = inlined_call_operand.hbm [shape: f32[1,128], index: 3, kind: input, shape index: {}]
  %s4 = inlined_call_operand.vmem [shape: bf16[32,128], index: 4, kind: input, shape index: {}]
  %s5 = inlined_call_operand.vmem [shape: bf16[32,128], index: 5, kind: input, shape index: {}]
  %s6 = inlined_call_operand.hbm [shape: f32[1,128], index: 6, kind: input, shape index: {}]
  %s7 = inlined_call_operand.vmem [shape: bf16[32,128], index: 7, kind: input, shape index: {}]
  %s8 = inlined_call_operand.vmem [shape: f32[1,128], index: 8, kind: input, shape index: {}]
  %s9 = inlined_call_operand.vmem [shape: f32[8,2,128], index: 9, kind: output, shape index: {}]
  %s10 = sld [smem:[#allocation0]]
  $region85: #{lstm_decoder_forward.1} parent=0
    _
  %s12 = ssub.s32 1, %s10
  %s13 = scalar_select 0, %s12, %s10
  $region1: #{lstm_decoder_forward.1} parent=0
    #allocation7 [shape = 'u8[1024]{0}', space=vmem, size = 0x400, scoped, tag = 'input window, operand 0, single buffered']
    #allocation8 [shape = 's32[2]{0}', space=sflag, size = 0x8, scoped, tag = 'scoped memory for lstm_decoder_forward.1']
    #allocation9 [shape = 'u8[512]{0}', space=vmem, size = 0x400, scoped, tag = 'input window, operand 3, single buffered']
    #allocation10 [shape = 's32[1]{0}', space=sflag, size = 0x4, scoped, tag = 'scoped memory for lstm_decoder_forward.1']
    #allocation11 [shape = 'u8[512]{0}', space=vmem, size = 0x400, scoped, tag = 'input window, operand 6, single buffered']
    %14 = vsyncpa [#allocation8], 0
    %15 = vsyncpa [#allocation10], 0
    loop: start=0, step=1, limit=4
    $region2: #{lstm_decoder_forward.1} parent=1 // loop_pre_header
      _
    $region3: #{lstm_decoder_forward.1} parent=1 // loop_header
      %s17 = sphi 0, %s21
      %p18 = scmp.ge.s32.totalorder %s17, 4
      %s24 = sphi 0, %s36
      %s25 = sphi 0, %s32
      %s26 = sphi 0, %s24
      %s27 = sphi 0, %s25
      %s28 = sphi 0, %s26
      %s29 = sphi 0, %s27
      %s39 = sphi 0, %s41
      %s42 = sphi 0, %s39
      %s43 = sphi 0, %s42
      %s59 = sphi 0, %s43
      %s63 = sphi 0, %s63
      %s65 = sphi 0, %s63
      %s66 = sphi 0, %s65
      %s80 = sphi 0, %s66
      %s84 = sphi 0, %s84
      %s86 = sphi 0, %s84
      %s87 = sphi 0, %s86
      %s101 = sphi 0, %s87
      %s105 = sphi 0, %s105
      %s107 = sphi 0, %s105
      %s108 = sphi 0, %s107
      %s122 = sphi 0, %s108
      %s126 = sphi 0, %s126
      %s128 = sphi 0, %s126
      %s129 = sphi 0, %s128
      %s143 = sphi 0, %s129
      %s147 = sphi 0, %s147
      %s149 = sphi 0, %s147
      %s150 = sphi 0, %s149
      %s164 = sphi 0, %s150
      %s168 = sphi 0, %s168
      %s170 = sphi 0, %s168
      %s171 = sphi 0, %s170
      %s185 = sphi 0, %s171
      %s189 = sphi 0, %s189
      %s191 = sphi 0, %s189
      %s192 = sphi 0, %s191
      %s206 = sphi 0, %s192
      %s210 = sphi 0, %s210
      %s212 = sphi 0, %s210
      %s213 = sphi 0, %s212
      %s227 = sphi 0, %s213
      %s235 = sphi 0, %s237
      %s238 = sphi 0, %s235
      %s239 = sphi 0, %s238
      %s255 = sphi 0, %s239
    $region4: #{lstm_decoder_forward.1} parent=1 // loop_header_branch
      %20 = sbr.rel (%p18) target = $region8
    $region5: #{lstm_decoder_forward.1} parent=1 // loop_body
      %s22 = ssub.s32 %s17, 1
      %s23 = ssub.s32 %s17, 2
      %s30 = sadd.s32 1, %s25
      %p31 = scmp.ge.s32.totalorder %s30, 2
      %s32 = scalar_select %p31, 0, %s30
      %s33 = sadd.s32 1, %s24
      %s34 = scalar_select %p31, %s33, %s24
      %p35 = scmp.ge.s32.totalorder %s34, 1
      %s36 = scalar_select %p35, 0, %s34
      %s37 = ssub.s32 %s24, %s36
      %p38 = scmp.eq.s32.totalorder %s37, 0
      %s40 = sadd.s32 %s39, 1
      %s41 = scalar_select %p38, %s39, %s40
      %p44 = pneg %p38
      %p45 = scmp.eq.s32.totalorder %s17, 1
      %p46 = por %p44, %p45
      %p47 = scmp.ne.s32.totalorder %s39, %s42
      %p48 = scmp.eq.s32.totalorder %s17, 0
      %p49 = por %p47, %p48
      %p50 = scmp.ne.s32.totalorder %s39, %s42
      %p51 = scmp.eq.s32.totalorder %s22, 1
      %p52 = por %p50, %p51
      %p53 = scmp.ne.s32.totalorder %s42, %s43
      %p54 = scmp.eq.s32.totalorder %s22, 0
      %p55 = por %p53, %p54
      %p56 = scmp.ne.s32.totalorder %s42, %s43
      %p57 = scmp.eq.s32.totalorder %s23, 1
      %p58 = por %p56, %p57
      %p60 = scmp.ne.s32.totalorder %s43, %s59
      %p61 = scmp.eq.s32.totalorder %s23, 0
      %p62 = por %p60, %p61
      %s64 = sadd.s32 %s63, 1
      %p67 = scmp.eq.s32.totalorder %s17, 1
      %p68 = scmp.ne.s32.totalorder %s63, %s65
      %p69 = scmp.eq.s32.totalorder %s17, 0
      %p70 = por %p68, %p69
      %p71 = scmp.ne.s32.totalorder %s63, %s65
      %p72 = scmp.eq.s32.totalorder %s22, 1
      %p73 = por %p71, %p72
      %p74 = scmp.ne.s32.totalorder %s65, %s66
      %p75 = scmp.eq.s32.totalorder %s22, 0
      %p76 = por %p74, %p75
      %p77 = scmp.ne.s32.totalorder %s65, %s66
      %p78 = scmp.eq.s32.totalorder %s23, 1
      %p79 = por %p77, %p78
      %p81 = scmp.ne.s32.totalorder %s66, %s80
      %p82 = scmp.eq.s32.totalorder %s23, 0
      %p83 = por %p81, %p82
      %s85 = sadd.s32 %s84, 1
      %p88 = scmp.eq.s32.totalorder %s17, 1
      %p89 = scmp.ne.s32.totalorder %s84, %s86
      %p90 = scmp.eq.s32.totalorder %s17, 0
      %p91 = por %p89, %p90
      %p92 = scmp.ne.s32.totalorder %s84, %s86
      %p93 = scmp.eq.s32.totalorder %s22, 1
      %p94 = por %p92, %p93
      %p95 = scmp.ne.s32.totalorder %s86, %s87
      %p96 = scmp.eq.s32.totalorder %s22, 0
      %p97 = por %p95, %p96
      %p98 = scmp.ne.s32.totalorder %s86, %s87
      %p99 = scmp.eq.s32.totalorder %s23, 1
      %p100 = por %p98, %p99
      %p102 = scmp.ne.s32.totalorder %s87, %s101
      %p103 = scmp.eq.s32.totalorder %s23, 0
      %p104 = por %p102, %p103
      %s106 = sadd.s32 %s105, 1
      %p109 = scmp.eq.s32.totalorder %s17, 1
      %p110 = scmp.ne.s32.totalorder %s105, %s107
      %p111 = scmp.eq.s32.totalorder %s17, 0
      %p112 = por %p110, %p111
      %p113 = scmp.ne.s32.totalorder %s105, %s107
      %p114 = scmp.eq.s32.totalorder %s22, 1
      %p115 = por %p113, %p114
      %p116 = scmp.ne.s32.totalorder %s107, %s108
      %p117 = scmp.eq.s32.totalorder %s22, 0
      %p118 = por %p116, %p117
      %p119 = scmp.ne.s32.totalorder %s107, %s108
      %p120 = scmp.eq.s32.totalorder %s23, 1
      %p121 = por %p119, %p120
      %p123 = scmp.ne.s32.totalorder %s108, %s122
      %p124 = scmp.eq.s32.totalorder %s23, 0
      %p125 = por %p123, %p124
      %s127 = sadd.s32 %s126, 1
      %p130 = scmp.eq.s32.totalorder %s17, 1
      %p131 = scmp.ne.s32.totalorder %s126, %s128
      %p132 = scmp.eq.s32.totalorder %s17, 0
      %p133 = por %p131, %p132
      %p134 = scmp.ne.s32.totalorder %s126, %s128
      %p135 = scmp.eq.s32.totalorder %s22, 1
      %p136 = por %p134, %p135
      %p137 = scmp.ne.s32.totalorder %s128, %s129
      %p138 = scmp.eq.s32.totalorder %s22, 0
      %p139 = por %p137, %p138
      %p140 = scmp.ne.s32.totalorder %s128, %s129
      %p141 = scmp.eq.s32.totalorder %s23, 1
      %p142 = por %p140, %p141
      %p144 = scmp.ne.s32.totalorder %s129, %s143
      %p145 = scmp.eq.s32.totalorder %s23, 0
      %p146 = por %p144, %p145
      %s148 = sadd.s32 %s147, 1
      %p151 = scmp.eq.s32.totalorder %s17, 1
      %p152 = scmp.ne.s32.totalorder %s147, %s149
      %p153 = scmp.eq.s32.totalorder %s17, 0
      %p154 = por %p152, %p153
      %p155 = scmp.ne.s32.totalorder %s147, %s149
      %p156 = scmp.eq.s32.totalorder %s22, 1
      %p157 = por %p155, %p156
      %p158 = scmp.ne.s32.totalorder %s149, %s150
      %p159 = scmp.eq.s32.totalorder %s22, 0
      %p160 = por %p158, %p159
      %p161 = scmp.ne.s32.totalorder %s149, %s150
      %p162 = scmp.eq.s32.totalorder %s23, 1
      %p163 = por %p161, %p162
      %p165 = scmp.ne.s32.totalorder %s150, %s164
      %p166 = scmp.eq.s32.totalorder %s23, 0
      %p167 = por %p165, %p166
      %s169 = sadd.s32 %s168, 1
      %p172 = scmp.eq.s32.totalorder %s17, 1
      %p173 = scmp.ne.s32.totalorder %s168, %s170
      %p174 = scmp.eq.s32.totalorder %s17, 0
      %p175 = por %p173, %p174
      %p176 = scmp.ne.s32.totalorder %s168, %s170
      %p177 = scmp.eq.s32.totalorder %s22, 1
      %p178 = por %p176, %p177
      %p179 = scmp.ne.s32.totalorder %s170, %s171
      %p180 = scmp.eq.s32.totalorder %s22, 0
      %p181 = por %p179, %p180
      %p182 = scmp.ne.s32.totalorder %s170, %s171
      %p183 = scmp.eq.s32.totalorder %s23, 1
      %p184 = por %p182, %p183
      %p186 = scmp.ne.s32.totalorder %s171, %s185
      %p187 = scmp.eq.s32.totalorder %s23, 0
      %p188 = por %p186, %p187
      %s190 = sadd.s32 %s189, 1
      %p193 = scmp.eq.s32.totalorder %s17, 1
      %p194 = scmp.ne.s32.totalorder %s189, %s191
      %p195 = scmp.eq.s32.totalorder %s17, 0
      %p196 = por %p194, %p195
      %p197 = scmp.ne.s32.totalorder %s189, %s191
      %p198 = scmp.eq.s32.totalorder %s22, 1
      %p199 = por %p197, %p198
      %p200 = scmp.ne.s32.totalorder %s191, %s192
      %p201 = scmp.eq.s32.totalorder %s22, 0
      %p202 = por %p200, %p201
      %p203 = scmp.ne.s32.totalorder %s191, %s192
      %p204 = scmp.eq.s32.totalorder %s23, 1
      %p205 = por %p203, %p204
      %p207 = scmp.ne.s32.totalorder %s192, %s206
      %p208 = scmp.eq.s32.totalorder %s23, 0
      %p209 = por %p207, %p208
      %s211 = sadd.s32 %s210, 1
      %p214 = scmp.eq.s32.totalorder %s17, 1
      %p215 = scmp.ne.s32.totalorder %s210, %s212
      %p216 = scmp.eq.s32.totalorder %s17, 0
      %p217 = por %p215, %p216
      %p218 = scmp.ne.s32.totalorder %s210, %s212
      %p219 = scmp.eq.s32.totalorder %s22, 1
      %p220 = por %p218, %p219
      %p221 = scmp.ne.s32.totalorder %s212, %s213
      %p222 = scmp.eq.s32.totalorder %s22, 0
      %p223 = por %p221, %p222
      %p224 = scmp.ne.s32.totalorder %s212, %s213
      %p225 = scmp.eq.s32.totalorder %s23, 1
      %p226 = por %p224, %p225
      %p228 = scmp.ne.s32.totalorder %s213, %s227
      %p229 = scmp.eq.s32.totalorder %s23, 0
      %p230 = por %p228, %p229
      %s231 = ssub.s32 %s25, %s32
      %s232 = ssub.s32 %s24, %s36
      %s233 = sor.u32 %s231, %s232
      %p234 = scmp.eq.s32.totalorder %s233, 0
      %s236 = sadd.s32 %s235, 1
      %s237 = scalar_select %p234, %s235, %s236
      %p240 = pneg %p234
      %p241 = scmp.eq.s32.totalorder %s17, 1
      %p242 = por %p240, %p241
      %p243 = scmp.ne.s32.totalorder %s235, %s238
      %p244 = scmp.eq.s32.totalorder %s17, 0
      %p245 = por %p243, %p244
      %p246 = scmp.ne.s32.totalorder %s235, %s238
      %p247 = scmp.eq.s32.totalorder %s22, 1
      %p248 = por %p246, %p247
      %p249 = scmp.ne.s32.totalorder %s238, %s239
      %p250 = scmp.eq.s32.totalorder %s22, 0
      %p251 = por %p249, %p250
      %p252 = scmp.ne.s32.totalorder %s238, %s239
      %p253 = scmp.eq.s32.totalorder %s23, 1
      %p254 = por %p252, %p253
      %p256 = scmp.ne.s32.totalorder %s239, %s255
      %p257 = scmp.eq.s32.totalorder %s23, 0
      %p258 = por %p256, %p257
      %p259 = scmp.le.s32.totalorder 1, %s17
      %p260 = scmp.lt.s32.totalorder %s17, 3
      %p261 = pnand %p259, %p260
      %p262 = pneg %p261
      // Predicated region
      $region9: #{lstm_decoder_forward.1} parent=5 // pred_check
        _
      $region10: #{lstm_decoder_forward.1} parent=5 // pred_check_branch
        %264 = sbr.rel (%p261) target = $region12
      $region11: #{lstm_decoder_forward.1} parent=5 // pred_region
        %s265 = ssub.s32 %s17, 1
        // Predicated region
        $region13: #{lstm_decoder_forward.1} parent=11 // pred_check
          %p266 = pneg %p55
        $region14: #{lstm_decoder_forward.1} parent=11 // pred_check_branch
          %268 = sbr.rel (%p266) target = $region16
        $region15: #{lstm_decoder_forward.1} parent=11 // pred_region
          %270 = vsyncadd [#allocation8], 0
          %s271 = smul.addr %s26, 2
          %s272 = scalar_lea.hbm %s0, %s271
          %s274 = sshll.u32 %s272, 4
          %s275 = int_to_ptr.hbm [resolvable:$true] %s274
          %s276 = sshll.u32 [#allocation7], 4
          %s277 = int_to_ptr.vmem [resolvable:$true] %s276
          %279 = dma.hbm_to_vmem [thread:$0]  %s275, 32, %s277, [#allocation8]
        $region16: #{lstm_decoder_forward.1} parent=11 // pred_fallthru
          _
        // Predicated region
        $region17: #{lstm_decoder_forward.1} parent=11 // pred_check
          %p280 = pneg %p76
        $region18: #{lstm_decoder_forward.1} parent=11 // pred_check_branch
          %282 = sbr.rel (%p280) target = $region20
        $region19: #{lstm_decoder_forward.1} parent=11 // pred_region
          _
        $region20: #{lstm_decoder_forward.1} parent=11 // pred_fallthru
          _
        // Predicated region
        $region21: #{lstm_decoder_forward.1} parent=11 // pred_check
          %p283 = pneg %p97
        $region22: #{lstm_decoder_forward.1} parent=11 // pred_check_branch
          %285 = sbr.rel (%p283) target = $region24
        $region23: #{lstm_decoder_forward.1} parent=11 // pred_region
          _
        $region24: #{lstm_decoder_forward.1} parent=11 // pred_fallthru
          _
        // Predicated region
        $region25: #{lstm_decoder_forward.1} parent=11 // pred_check
          %p286 = pneg %p118
        $region26: #{lstm_decoder_forward.1} parent=11 // pred_check_branch
          %288 = sbr.rel (%p286) target = $region28
        $region27: #{lstm_decoder_forward.1} parent=11 // pred_region
          %290 = vsyncadd [#allocation10], 0
          %s292 = sshll.u32 %s3, 4
          %s293 = int_to_ptr.hbm [resolvable:$true] %s292
          %s294 = sshll.u32 [#allocation9], 4
          %s295 = int_to_ptr.vmem [resolvable:$true] %s294
          %297 = dma.hbm_to_vmem [thread:$0]  %s293, 16, %s295, [#allocation10]
        $region28: #{lstm_decoder_forward.1} parent=11 // pred_fallthru
          _
        // Predicated region
        $region29: #{lstm_decoder_forward.1} parent=11 // pred_check
          %p298 = pneg %p139
        $region30: #{lstm_decoder_forward.1} parent=11 // pred_check_branch
          %300 = sbr.rel (%p298) target = $region32
        $region31: #{lstm_decoder_forward.1} parent=11 // pred_region
          _
        $region32: #{lstm_decoder_forward.1} parent=11 // pred_fallthru
          _
        // Predicated region
        $region33: #{lstm_decoder_forward.1} parent=11 // pred_check
          %p301 = pneg %p160
        $region34: #{lstm_decoder_forward.1} parent=11 // pred_check_branch
          %303 = sbr.rel (%p301) target = $region36
        $region35: #{lstm_decoder_forward.1} parent=11 // pred_region
          _
        $region36: #{lstm_decoder_forward.1} parent=11 // pred_fallthru
          _
        // Predicated region
        $region37: #{lstm_decoder_forward.1} parent=11 // pred_check
          %p304 = pneg %p181
        $region38: #{lstm_decoder_forward.1} parent=11 // pred_check_branch
          %306 = sbr.rel (%p304) target = $region40
        $region39: #{lstm_decoder_forward.1} parent=11 // pred_region
          %308 = vsyncadd [#allocation10], 0
          %s310 = sshll.u32 %s6, 4
          %s311 = int_to_ptr.hbm [resolvable:$true] %s310
          %s312 = sshll.u32 [#allocation11], 4
          %s313 = int_to_ptr.vmem [resolvable:$true] %s312
          %315 = dma.hbm_to_vmem [thread:$0]  %s311, 16, %s313, [#allocation10]
        $region40: #{lstm_decoder_forward.1} parent=11 // pred_fallthru
          _
        // Predicated region
        $region41: #{lstm_decoder_forward.1} parent=11 // pred_check
          %p316 = pneg %p202
        $region42: #{lstm_decoder_forward.1} parent=11 // pred_check_branch
          %318 = sbr.rel (%p316) target = $region44
        $region43: #{lstm_decoder_forward.1} parent=11 // pred_region
          _
        $region44: #{lstm_decoder_forward.1} parent=11 // pred_fallthru
          _
        // Predicated region
        $region45: #{lstm_decoder_forward.1} parent=11 // pred_check
          %p319 = pneg %p223
        $region46: #{lstm_decoder_forward.1} parent=11 // pred_check_branch
          %321 = sbr.rel (%p319) target = $region48
        $region47: #{lstm_decoder_forward.1} parent=11 // pred_region
          _
        $region48: #{lstm_decoder_forward.1} parent=11 // pred_fallthru
          _
      $region12: #{lstm_decoder_forward.1} parent=5 // pred_fallthru
        _
      %p322 = scmp.lt.s32.totalorder %s17, 2
      // Predicated region
      $region49: #{lstm_decoder_forward.1} parent=5 // pred_check
        %p323 = pneg %p322
      $region50: #{lstm_decoder_forward.1} parent=5 // pred_check_branch
        %325 = sbr.rel (%p323) target = $region52
      $region51: #{lstm_decoder_forward.1} parent=5 // pred_region
        _
      $region52: #{lstm_decoder_forward.1} parent=5 // pred_fallthru
        _
      %p326 = scmp.le.s32.totalorder 1, %s17
      %p327 = scmp.lt.s32.totalorder %s17, 3
      %p328 = pnand %p326, %p327
      %p329 = pneg %p328
      // Predicated region
      $region53: #{lstm_decoder_forward.1} parent=5 // pred_check
        _
      $region54: #{lstm_decoder_forward.1} parent=5 // pred_check_branch
        %331 = sbr.rel (%p328) target = $region56
      $region55: #{lstm_decoder_forward.1} parent=5 // pred_region
        %s332 = ssub.s32 %s17, 1
        // Predicated region
        $region57: #{lstm_decoder_forward.1} parent=55 // pred_check
          %p333 = pneg %p55
        $region58: #{lstm_decoder_forward.1} parent=55 // pred_check_branch
          %335 = sbr.rel (%p333) target = $region60
        $region59: #{lstm_decoder_forward.1} parent=55 // pred_region
          %337 = dma.done [#allocation8], 32
        $region60: #{lstm_decoder_forward.1} parent=55 // pred_fallthru
          _
        // Predicated region
        $region61: #{lstm_decoder_forward.1} parent=55 // pred_check
          %p338 = pneg %p118
        $region62: #{lstm_decoder_forward.1} parent=55 // pred_check_branch
          %340 = sbr.rel (%p338) target = $region64
        $region63: #{lstm_decoder_forward.1} parent=55 // pred_region
          %342 = dma.done [#allocation10], 16
        $region64: #{lstm_decoder_forward.1} parent=55 // pred_fallthru
          _
        // Predicated region
        $region65: #{lstm_decoder_forward.1} parent=55 // pred_check
          %p343 = pneg %p181
        $region66: #{lstm_decoder_forward.1} parent=55 // pred_check_branch
          %345 = sbr.rel (%p343) target = $region68
        $region67: #{lstm_decoder_forward.1} parent=55 // pred_region
          %347 = dma.done [#allocation10], 16
        $region68: #{lstm_decoder_forward.1} parent=55 // pred_fallthru
          _
        %p348 = pneg %p55
        %p349 = pneg %p52
        %p350 = pneg %p76
        %p351 = pneg %p73
        %p352 = pneg %p97
        %p353 = pneg %p94
        %p354 = pneg %p118
        %p355 = pneg %p115
        %p356 = pneg %p139
        %p357 = pneg %p136
        %p358 = pneg %p160
        %p359 = pneg %p157
        %p360 = pneg %p181
        %p361 = pneg %p178
        %p362 = pneg %p202
        %p363 = pneg %p199
        %p364 = pneg %p223
        %p365 = pneg %p220
        %p366 = pneg %p251
        %p367 = pneg %p248
        %s368 = smul.u32 4, %s27
        %p369 = scmp.lt.s32.totalorder %s368, 7
        %s370 = scalar_select %p369, %s368, 7
        %p371 = scmp.lt.s32.totalorder %s26, 0
        %s372 = scalar_select %p371, %s26, 0
        %s373 = sadd.s32 %s372, %s370
        %s374 = smul.addr %s373, 2
        %s375 = scalar_lea.vmem %s9, %s374
        %s376 = smul.u32 4, %s27
        %p377 = scmp.lt.s32.totalorder %s376, 7
        %s378 = scalar_select %p377, %s376, 7
        %p379 = scmp.lt.s32.totalorder %s26, 0
        %s380 = scalar_select %p379, %s26, 0
        %s381 = sadd.s32 %s380, %s378
        %s382 = smul.addr %s381, 2
        %s383 = scalar_lea.vmem %s9, %s382
        %s384 = smul.u32 4, %s27
        %p386 = scmp.eq.s32.totalorder %s27, 0
        // Predicated region
        $region69: #{lstm_decoder_forward.1} parent=55 // pred_check
          %p387 = pneg %p386
        $region70: #{lstm_decoder_forward.1} parent=55 // pred_check_branch
          %389 = sbr.rel (%p387) target = $region72
        $region71: #{lstm_decoder_forward.1} parent=55 // pred_region
          %v390 = vld [vmem:[#allocation7] sm:$0x3]
          %v391 = vpack.c.bf16 %v390, %v390
          %v392 = vld [vmem:[%s1] sm:$0xf]
          %v393 = vld [vmem:[%s1 + $0x4] sm:$0xf]
          %v394 = vld [vmem:[%s1 + $0x8] sm:$0xf]
          %v395 = vld [vmem:[%s1 + $0xc] sm:$0xf]
          %v396 = vld [vmem:[#allocation9] sm:$0x1]
          %v398 = vperm.slane %v396, 0
          %v404 = vunpack.c.l.b16 %v392
          %v405 = vunpack.c.l.b16 %v393
          %v406 = vunpack.c.l.b16 %v394
          %v407 = vunpack.c.l.b16 %v395
          %v408 = vpack.c.b16 %v405, %v404
          %v409 = vpack.c.b16 %v407, %v406
          %vm412 = vcmask 261120
          %v414 = vsel %vm412, %v391, 0
          %416 = vmatpush.bf16.msra.mxu0 0
          %417 = vmatpush.bf16.msra.mxu0 0
          %418 = vmatpush.bf16.msra.mxu0 0
          %419 = vmatpush.bf16.msra.mxu0 0
          %420 = vmatpush.bf16.msra.mxu0 0
          %421 = vmatpush.bf16.msra.mxu0 0
          %422 = vmatpush.bf16.msra.mxu0 %v409
          %423 = vmatpush.bf16.msra.mxu0 %v408
          %424 = vmatmul.bf16.gmra.mxu0 %v414
          %v425 = vpop.f32.mrf.mxu0
          %v426 = vadd.f32 %v398, %v425
          %v427 = vpop.f32.mrf.mxu0
          %428 = vdwg.mxu0
          %429 = vst [vmem:[#allocation2] sm:$0x3] %v426
          %vm430 = vcmask 254976
          %431 = vst.msk [vmem:[#allocation3] sm:$0x3] %vm430, 0.0
          %432 = vst.msk [vmem:[#allocation4] sm:$0x3] %vm430, 0.0
          %433 = vst.msk [vmem:[#allocation5] sm:$0x3] %vm430, 0.0
          %434 = vst.msk [vmem:[#allocation6] sm:$0x3] %vm430, 0.0
        $region72: #{lstm_decoder_forward.1} parent=55 // pred_fallthru
          _
        %v435 = vld [vmem:[#allocation2] sm:$0x3]
        %v436 = vld [vmem:[%s2] sm:$0xf]
        %v437 = vld [vmem:[%s2 + $0x4] sm:$0xf]
        %v438 = vld [vmem:[%s2 + $0x8] sm:$0xf]
        %v439 = vld [vmem:[%s2 + $0xc] sm:$0xf]
        %v440 = vld [vmem:[%s4] sm:$0xf]
        %v441 = vld [vmem:[%s4 + $0x4] sm:$0xf]
        %v442 = vld [vmem:[%s4 + $0x8] sm:$0xf]
        %v443 = vld [vmem:[%s4 + $0xc] sm:$0xf]
        %v444 = vld [vmem:[%s5] sm:$0xf]
        %v445 = vld [vmem:[%s5 + $0x4] sm:$0xf]
        %v446 = vld [vmem:[%s5 + $0x8] sm:$0xf]
        %v447 = vld [vmem:[%s5 + $0xc] sm:$0xf]
        %v448 = vld [vmem:[%s7] sm:$0xf]
        %v449 = vld [vmem:[%s7 + $0x4] sm:$0xf]
        %v450 = vld [vmem:[%s7 + $0x8] sm:$0xf]
        %v451 = vld [vmem:[%s7 + $0xc] sm:$0xf]
        %v452 = vld [vmem:[#allocation11] sm:$0x1]
        %v454 = vperm.slane %v452, 0
        %v456 = vld [vmem:[%s8] sm:$0x1]
        %v458 = vperm.slane %v456, 0
        %v460 = vld [vmem:[#allocation3] sm:$0x3]
        %v461 = vld [vmem:[#allocation4] sm:$0x3]
        %v462 = vld [vmem:[#allocation5] sm:$0x3]
        %v463 = vld [vmem:[#allocation6] sm:$0x3]
        %v464 = vpack.c.bf16 %v460, %v460
        %v469 = vunpack.c.l.b16 %v436
        %v470 = vunpack.c.l.b16 %v437
        %v471 = vunpack.c.l.b16 %v438
        %v472 = vunpack.c.l.b16 %v439
        %v473 = vpack.c.b16 %v470, %v469
        %v474 = vpack.c.b16 %v472, %v471
        %vm477 = vcmask 261120
        %v479 = vsel %vm477, %v464, 0
        %481 = vmatpush.bf16.msra.mxu0 0
        %482 = vmatpush.bf16.msra.mxu0 0
        %483 = vmatpush.bf16.msra.mxu0 0
        %484 = vmatpush.bf16.msra.mxu0 0
        %485 = vmatpush.bf16.msra.mxu0 0
        %486 = vmatpush.bf16.msra.mxu0 0
        %487 = vmatpush.bf16.msra.mxu0 %v474
        %488 = vmatpush.bf16.msra.mxu0 %v473
        %489 = vmatmul.bf16.gmra.mxu0 %v479
        %v490 = vpop.f32.mrf.mxu0
        %v491 = vadd.f32 0.0, %v490
        %v492 = vpop.f32.mrf.mxu0
        %493 = vdwg.mxu0
        %v494 = vadd.f32 %v435, %v491
        %v495 = vmul.f32 %v494, 0.5
        %v496 = vtanh.pop %v495
        %v497 = vadd.f32 %v496, 1.0
        %v498 = vmul.f32 %v497, 0.5
        %v499 = vtanh.pop %v494
        %501 = vrot.lane.b32.xlu0 %v461, 32
        %v502 = vpop.permute.xlu0 %501
        %v504 = vmul.f32 %v498, %v502
        %506 = vrot.lane.b32.xlu0 %v499, 64
        %v507 = vpop.permute.xlu0 %506
        %v509 = vmul.f32 %v498, %v507
        %511 = vrot.lane.b32.xlu0 %v509, 32
        %v512 = vpop.permute.xlu0 %511
        %v514 = vadd.f32 %v504, %v512
        %v515 = vtanh.pop %v514
        %517 = vrot.lane.b32.xlu0 %v515, 64
        %v518 = vpop.permute.xlu0 %517
        %v520 = vmul.f32 %v498, %v518
        %v521 = vpack.c.bf16 %v520, %v520
        %v522 = vpack.c.bf16 %v462, %v462
        %v527 = vunpack.c.l.b16 %v444
        %v528 = vunpack.c.l.b16 %v445
        %v529 = vunpack.c.l.b16 %v446
        %v530 = vunpack.c.l.b16 %v447
        %v531 = vpack.c.b16 %v528, %v527
        %v532 = vpack.c.b16 %v530, %v529
        %v536 = vsel %vm477, %v522, 0
        %538 = vmatpush.bf16.msra.mxu0 0
        %539 = vmatpush.bf16.msra.mxu0 0
        %540 = vmatpush.bf16.msra.mxu0 0
        %541 = vmatpush.bf16.msra.mxu0 0
        %542 = vmatpush.bf16.msra.mxu0 0
        %543 = vmatpush.bf16.msra.mxu0 0
        %544 = vmatpush.bf16.msra.mxu0 %v532
        %545 = vmatpush.bf16.msra.mxu0 %v531
        %546 = vmatmul.bf16.gmra.mxu0 %v536
        %v547 = vpop.f32.mrf.mxu0
        %v548 = vadd.f32 0.0, %v547
        %v549 = vpop.f32.mrf.mxu0
        %550 = vdwg.mxu0
        %552 = vrot.lane.b32.xlu0 %v521, 32
        %v553 = vpop.permute.xlu0 %552
        %v558 = vunpack.c.l.b16 %v440
        %v559 = vunpack.c.l.b16 %v441
        %v560 = vunpack.c.l.b16 %v442
        %v561 = vunpack.c.l.b16 %v443
        %v562 = vpack.c.b16 %v559, %v558
        %v563 = vpack.c.b16 %v561, %v560
        %v567 = vsel %vm477, %v553, 0
        %569 = vmatpush.bf16.msra.mxu0 0
        %570 = vmatpush.bf16.msra.mxu0 0
        %571 = vmatpush.bf16.msra.mxu0 0
        %572 = vmatpush.bf16.msra.mxu0 0
        %573 = vmatpush.bf16.msra.mxu0 0
        %574 = vmatpush.bf16.msra.mxu0 0
        %575 = vmatpush.bf16.msra.mxu0 %v563
        %576 = vmatpush.bf16.msra.mxu0 %v562
        %577 = vmatmul.bf16.gmra.mxu0 %v567
        %v578 = vpop.f32.mrf.mxu0
        %v579 = vadd.f32 %v548, %v578
        %v580 = vpop.f32.mrf.mxu0
        %581 = vdwg.mxu0
        %v582 = vadd.f32 %v579, %v454
        %v583 = vmul.f32 %v582, 0.5
        %v584 = vtanh.pop %v583
        %v585 = vadd.f32 %v584, 1.0
        %v586 = vmul.f32 %v585, 0.5
        %v587 = vtanh.pop %v582
        %589 = vrot.lane.b32.xlu0 %v463, 32
        %v590 = vpop.permute.xlu0 %589
        %v592 = vmul.f32 %v586, %v590
        %594 = vrot.lane.b32.xlu0 %v587, 64
        %v595 = vpop.permute.xlu0 %594
        %v597 = vmul.f32 %v586, %v595
        %599 = vrot.lane.b32.xlu0 %v597, 32
        %v600 = vpop.permute.xlu0 %599
        %v602 = vadd.f32 %v592, %v600
        %v603 = vtanh.pop %v602
        %605 = vrot.lane.b32.xlu0 %v603, 64
        %v606 = vpop.permute.xlu0 %605
        %v608 = vmul.f32 %v586, %v606
        %v609 = vpack.c.bf16 %v608, %v608
        %611 = vrot.lane.b32.xlu0 %v609, 32
        %v612 = vpop.permute.xlu0 %611
        %v617 = vunpack.c.l.b16 %v448
        %v618 = vunpack.c.l.b16 %v449
        %v619 = vunpack.c.l.b16 %v450
        %v620 = vunpack.c.l.b16 %v451
        %v621 = vpack.c.b16 %v618, %v617
        %v622 = vpack.c.b16 %v620, %v619
        %v626 = vsel %vm477, %v612, 0
        %628 = vmatpush.bf16.msra.mxu0 0
        %629 = vmatpush.bf16.msra.mxu0 0
        %630 = vmatpush.bf16.msra.mxu0 0
        %631 = vmatpush.bf16.msra.mxu0 0
        %632 = vmatpush.bf16.msra.mxu0 0
        %633 = vmatpush.bf16.msra.mxu0 0
        %634 = vmatpush.bf16.msra.mxu0 %v622
        %635 = vmatpush.bf16.msra.mxu0 %v621
        %636 = vmatmul.bf16.gmra.mxu0 %v626
        %v637 = vpop.f32.mrf.mxu0
        %v638 = vadd.f32 %v458, %v637
        %v639 = vpop.f32.mrf.mxu0
        %640 = vdwg.mxu0
        %641 = vst [vmem:[%s383] sm:$0x3] %v638
        %642 = vmatpush.bf16.msra.mxu0 0
        %643 = vmatpush.bf16.msra.mxu0 0
        %644 = vmatpush.bf16.msra.mxu0 0
        %645 = vmatpush.bf16.msra.mxu0 0
        %646 = vmatpush.bf16.msra.mxu0 0
        %647 = vmatpush.bf16.msra.mxu0 0
        %648 = vmatpush.bf16.msra.mxu0 %v474
        %649 = vmatpush.bf16.msra.mxu0 %v473
        %650 = vmatmul.bf16.gmra.mxu0 %v567
        %v651 = vpop.f32.mrf.mxu0
        %v652 = vadd.f32 0.0, %v651
        %v653 = vpop.f32.mrf.mxu0
        %654 = vdwg.mxu0
        %v655 = vadd.f32 %v435, %v652
        %v656 = vmul.f32 %v655, 0.5
        %v657 = vtanh.pop %v656
        %v658 = vadd.f32 %v657, 1.0
        %v659 = vmul.f32 %v658, 0.5
        %v660 = vtanh.pop %v655
        %v661 = vmul.f32 %v659, %v514
        %663 = vrot.lane.b32.xlu0 %v660, 64
        %v664 = vpop.permute.xlu0 %663
        %v666 = vmul.f32 %v659, %v664
        %668 = vrot.lane.b32.xlu0 %v666, 32
        %v669 = vpop.permute.xlu0 %668
        %v671 = vadd.f32 %v661, %v669
        %v672 = vtanh.pop %v671
        %674 = vrot.lane.b32.xlu0 %v672, 64
        %v675 = vpop.permute.xlu0 %674
        %v677 = vmul.f32 %v659, %v675
        %v678 = vpack.c.bf16 %v677, %v677
        %679 = vmatpush.bf16.msra.mxu0 0
        %680 = vmatpush.bf16.msra.mxu0 0
        %681 = vmatpush.bf16.msra.mxu0 0
        %682 = vmatpush.bf16.msra.mxu0 0
        %683 = vmatpush.bf16.msra.mxu0 0
        %684 = vmatpush.bf16.msra.mxu0 0
        %685 = vmatpush.bf16.msra.mxu0 %v532
        %686 = vmatpush.bf16.msra.mxu0 %v531
        %687 = vmatmul.bf16.gmra.mxu0 %v626
        %v688 = vpop.f32.mrf.mxu0
        %v689 = vadd.f32 0.0, %v688
        %v690 = vpop.f32.mrf.mxu0
        %691 = vdwg.mxu0
        %693 = vrot.lane.b32.xlu0 %v678, 32
        %v694 = vpop.permute.xlu0 %693
        %v696 = vsel %vm477, %v694, 0
        %698 = vmatpush.bf16.msra.mxu0 0
        %699 = vmatpush.bf16.msra.mxu0 0
        %700 = vmatpush.bf16.msra.mxu0 0
        %701 = vmatpush.bf16.msra.mxu0 0
        %702 = vmatpush.bf16.msra.mxu0 0
        %703 = vmatpush.bf16.msra.mxu0 0
        %704 = vmatpush.bf16.msra.mxu0 %v563
        %705 = vmatpush.bf16.msra.mxu0 %v562
        %706 = vmatmul.bf16.gmra.mxu0 %v696
        %v707 = vpop.f32.mrf.mxu0
        %v708 = vadd.f32 %v689, %v707
        %v709 = vpop.f32.mrf.mxu0
        %710 = vdwg.mxu0
        %v711 = vadd.f32 %v708, %v454
        %v712 = vmul.f32 %v711, 0.5
        %v713 = vtanh.pop %v712
        %v714 = vadd.f32 %v713, 1.0
        %v715 = vmul.f32 %v714, 0.5
        %v716 = vtanh.pop %v711
        %v717 = vmul.f32 %v715, %v602
        %719 = vrot.lane.b32.xlu0 %v716, 64
        %v720 = vpop.permute.xlu0 %719
        %v722 = vmul.f32 %v715, %v720
        %724 = vrot.lane.b32.xlu0 %v722, 32
        %v725 = vpop.permute.xlu0 %724
        %v727 = vadd.f32 %v717, %v725
        %v728 = vtanh.pop %v727
        %730 = vrot.lane.b32.xlu0 %v728, 64
        %v731 = vpop.permute.xlu0 %730
        %v733 = vmul.f32 %v715, %v731
        %v734 = vpack.c.bf16 %v733, %v733
        %736 = vrot.lane.b32.xlu0 %v734, 32
        %v737 = vpop.permute.xlu0 %736
        %v739 = vsel %vm477, %v737, 0
        %741 = vmatpush.bf16.msra.mxu0 0
        %742 = vmatpush.bf16.msra.mxu0 0
        %743 = vmatpush.bf16.msra.mxu0 0
        %744 = vmatpush.bf16.msra.mxu0 0
        %745 = vmatpush.bf16.msra.mxu0 0
        %746 = vmatpush.bf16.msra.mxu0 0
        %747 = vmatpush.bf16.msra.mxu0 %v622
        %748 = vmatpush.bf16.msra.mxu0 %v621
        %749 = vmatmul.bf16.gmra.mxu0 %v739
        %v750 = vpop.f32.mrf.mxu0
        %v751 = vadd.f32 %v458, %v750
        %v752 = vpop.f32.mrf.mxu0
        %753 = vdwg.mxu0
        %s754 = scalar_lea.vmem %s383, 2
        %755 = vst [vmem:[%s754] sm:$0x3] %v751
        %756 = vmatpush.bf16.msra.mxu0 0
        %757 = vmatpush.bf16.msra.mxu0 0
        %758 = vmatpush.bf16.msra.mxu0 0
        %759 = vmatpush.bf16.msra.mxu0 0
        %760 = vmatpush.bf16.msra.mxu0 0
        %761 = vmatpush.bf16.msra.mxu0 0
        %762 = vmatpush.bf16.msra.mxu0 %v474
        %763 = vmatpush.bf16.msra.mxu0 %v473
        %764 = vmatmul.bf16.gmra.mxu0 %v696
        %v765 = vpop.f32.mrf.mxu0
        %v766 = vadd.f32 0.0, %v765
        %v767 = vpop.f32.mrf.mxu0
        %768 = vdwg.mxu0
        %v769 = vadd.f32 %v435, %v766
        %v770 = vmul.f32 %v769, 0.5
        %v771 = vtanh.pop %v770
        %v772 = vadd.f32 %v771, 1.0
        %v773 = vmul.f32 %v772, 0.5
        %v774 = vtanh.pop %v769
        %v775 = vmul.f32 %v773, %v671
        %777 = vrot.lane.b32.xlu0 %v774, 64
        %v778 = vpop.permute.xlu0 %777
        %v780 = vmul.f32 %v773, %v778
        %782 = vrot.lane.b32.xlu0 %v780, 32
        %v783 = vpop.permute.xlu0 %782
        %v785 = vadd.f32 %v775, %v783
        %v786 = vtanh.pop %v785
        %788 = vrot.lane.b32.xlu0 %v786, 64
        %v789 = vpop.permute.xlu0 %788
        %v791 = vmul.f32 %v773, %v789
        %v792 = vpack.c.bf16 %v791, %v791
        %793 = vmatpush.bf16.msra.mxu0 0
        %794 = vmatpush.bf16.msra.mxu0 0
        %795 = vmatpush.bf16.msra.mxu0 0
        %796 = vmatpush.bf16.msra.mxu0 0
        %797 = vmatpush.bf16.msra.mxu0 0
        %798 = vmatpush.bf16.msra.mxu0 0
        %799 = vmatpush.bf16.msra.mxu0 %v532
        %800 = vmatpush.bf16.msra.mxu0 %v531
        %801 = vmatmul.bf16.gmra.mxu0 %v739
        %v802 = vpop.f32.mrf.mxu0
        %v803 = vadd.f32 0.0, %v802
        %v804 = vpop.f32.mrf.mxu0
        %805 = vdwg.mxu0
        %807 = vrot.lane.b32.xlu0 %v792, 32
        %v808 = vpop.permute.xlu0 %807
        %v810 = vsel %vm477, %v808, 0
        %812 = vmatpush.bf16.msra.mxu0 0
        %813 = vmatpush.bf16.msra.mxu0 0
        %814 = vmatpush.bf16.msra.mxu0 0
        %815 = vmatpush.bf16.msra.mxu0 0
        %816 = vmatpush.bf16.msra.mxu0 0
        %817 = vmatpush.bf16.msra.mxu0 0
        %818 = vmatpush.bf16.msra.mxu0 %v563
        %819 = vmatpush.bf16.msra.mxu0 %v562
        %820 = vmatmul.bf16.gmra.mxu0 %v810
        %v821 = vpop.f32.mrf.mxu0
        %v822 = vadd.f32 %v803, %v821
        %v823 = vpop.f32.mrf.mxu0
        %824 = vdwg.mxu0
        %v825 = vadd.f32 %v822, %v454
        %v826 = vmul.f32 %v825, 0.5
        %v827 = vtanh.pop %v826
        %v828 = vadd.f32 %v827, 1.0
        %v829 = vmul.f32 %v828, 0.5
        %v830 = vtanh.pop %v825
        %v831 = vmul.f32 %v829, %v727
        %833 = vrot.lane.b32.xlu0 %v830, 64
        %v834 = vpop.permute.xlu0 %833
        %v836 = vmul.f32 %v829, %v834
        %838 = vrot.lane.b32.xlu0 %v836, 32
        %v839 = vpop.permute.xlu0 %838
        %v841 = vadd.f32 %v831, %v839
        %v842 = vtanh.pop %v841
        %844 = vrot.lane.b32.xlu0 %v842, 64
        %v845 = vpop.permute.xlu0 %844
        %v847 = vmul.f32 %v829, %v845
        %v848 = vpack.c.bf16 %v847, %v847
        %850 = vrot.lane.b32.xlu0 %v848, 32
        %v851 = vpop.permute.xlu0 %850
        %v853 = vsel %vm477, %v851, 0
        %855 = vmatpush.bf16.msra.mxu0 0
        %856 = vmatpush.bf16.msra.mxu0 0
        %857 = vmatpush.bf16.msra.mxu0 0
        %858 = vmatpush.bf16.msra.mxu0 0
        %859 = vmatpush.bf16.msra.mxu0 0
        %860 = vmatpush.bf16.msra.mxu0 0
        %861 = vmatpush.bf16.msra.mxu0 %v622
        %862 = vmatpush.bf16.msra.mxu0 %v621
        %863 = vmatmul.bf16.gmra.mxu0 %v853
        %v864 = vpop.f32.mrf.mxu0
        %v865 = vadd.f32 %v458, %v864
        %v866 = vpop.f32.mrf.mxu0
        %867 = vdwg.mxu0
        %s868 = scalar_lea.vmem %s383, 4
        %869 = vst [vmem:[%s868] sm:$0x3] %v865
        %870 = vmatpush.bf16.msra.mxu0 0
        %871 = vmatpush.bf16.msra.mxu0 0
        %872 = vmatpush.bf16.msra.mxu0 0
        %873 = vmatpush.bf16.msra.mxu0 0
        %874 = vmatpush.bf16.msra.mxu0 0
        %875 = vmatpush.bf16.msra.mxu0 0
        %876 = vmatpush.bf16.msra.mxu0 %v474
        %877 = vmatpush.bf16.msra.mxu0 %v473
        %878 = vmatmul.bf16.gmra.mxu0 %v810
        %v879 = vpop.f32.mrf.mxu0
        %v880 = vadd.f32 0.0, %v879
        %v881 = vpop.f32.mrf.mxu0
        %882 = vdwg.mxu0
        %v883 = vadd.f32 %v435, %v880
        %v884 = vmul.f32 %v883, 0.5
        %v885 = vtanh.pop %v884
        %v886 = vadd.f32 %v885, 1.0
        %v887 = vmul.f32 %v886, 0.5
        %v888 = vtanh.pop %v883
        %v889 = vmul.f32 %v887, %v785
        %891 = vrot.lane.b32.xlu0 %v888, 64
        %v892 = vpop.permute.xlu0 %891
        %v894 = vmul.f32 %v887, %v892
        %896 = vrot.lane.b32.xlu0 %v894, 32
        %v897 = vpop.permute.xlu0 %896
        %v899 = vadd.f32 %v889, %v897
        %v900 = vtanh.pop %v899
        %902 = vrot.lane.b32.xlu0 %v900, 64
        %v903 = vpop.permute.xlu0 %902
        %v905 = vmul.f32 %v887, %v903
        %v906 = vpack.c.bf16 %v905, %v905
        %907 = vmatpush.bf16.msra.mxu0 0
        %908 = vmatpush.bf16.msra.mxu0 0
        %909 = vmatpush.bf16.msra.mxu0 0
        %910 = vmatpush.bf16.msra.mxu0 0
        %911 = vmatpush.bf16.msra.mxu0 0
        %912 = vmatpush.bf16.msra.mxu0 0
        %913 = vmatpush.bf16.msra.mxu0 %v532
        %914 = vmatpush.bf16.msra.mxu0 %v531
        %915 = vmatmul.bf16.gmra.mxu0 %v853
        %v916 = vpop.f32.mrf.mxu0
        %v917 = vadd.f32 0.0, %v916
        %v918 = vpop.f32.mrf.mxu0
        %919 = vdwg.mxu0
        %921 = vrot.lane.b32.xlu0 %v906, 32
        %v922 = vpop.permute.xlu0 %921
        %v924 = vsel %vm477, %v922, 0
        %926 = vmatpush.bf16.msra.mxu0 0
        %927 = vmatpush.bf16.msra.mxu0 0
        %928 = vmatpush.bf16.msra.mxu0 0
        %929 = vmatpush.bf16.msra.mxu0 0
        %930 = vmatpush.bf16.msra.mxu0 0
        %931 = vmatpush.bf16.msra.mxu0 0
        %932 = vmatpush.bf16.msra.mxu0 %v563
        %933 = vmatpush.bf16.msra.mxu0 %v562
        %934 = vmatmul.bf16.gmra.mxu0 %v924
        %v935 = vpop.f32.mrf.mxu0
        %v936 = vadd.f32 %v917, %v935
        %v937 = vpop.f32.mrf.mxu0
        %938 = vdwg.mxu0
        %v939 = vadd.f32 %v936, %v454
        %v940 = vmul.f32 %v939, 0.5
        %v941 = vtanh.pop %v940
        %v942 = vadd.f32 %v941, 1.0
        %v943 = vmul.f32 %v942, 0.5
        %v944 = vtanh.pop %v939
        %v945 = vmul.f32 %v943, %v841
        %947 = vrot.lane.b32.xlu0 %v944, 64
        %v948 = vpop.permute.xlu0 %947
        %v950 = vmul.f32 %v943, %v948
        %952 = vrot.lane.b32.xlu0 %v950, 32
        %v953 = vpop.permute.xlu0 %952
        %v955 = vadd.f32 %v945, %v953
        %v956 = vtanh.pop %v955
        %958 = vrot.lane.b32.xlu0 %v956, 64
        %v959 = vpop.permute.xlu0 %958
        %v961 = vmul.f32 %v943, %v959
        %v962 = vpack.c.bf16 %v961, %v961
        %964 = vrot.lane.b32.xlu0 %v962, 32
        %v965 = vpop.permute.xlu0 %964
        %v967 = vsel %vm477, %v965, 0
        %969 = vmatpush.bf16.msra.mxu0 0
        %970 = vmatpush.bf16.msra.mxu0 0
        %971 = vmatpush.bf16.msra.mxu0 0
        %972 = vmatpush.bf16.msra.mxu0 0
        %973 = vmatpush.bf16.msra.mxu0 0
        %974 = vmatpush.bf16.msra.mxu0 0
        %975 = vmatpush.bf16.msra.mxu0 %v622
        %976 = vmatpush.bf16.msra.mxu0 %v621
        %977 = vmatmul.bf16.gmra.mxu0 %v967
        %v978 = vpop.f32.mrf.mxu0
        %v979 = vadd.f32 %v458, %v978
        %v980 = vpop.f32.mrf.mxu0
        %981 = vdwg.mxu0
        %s982 = scalar_lea.vmem %s383, 6
        %983 = vst [vmem:[%s982] sm:$0x3] %v979
        %985 = vrot.lane.b32.xlu0 %v905, 32
        %v986 = vpop.permute.xlu0 %985
        %vm988 = vcmask 254976
        %989 = vst.msk [vmem:[#allocation3] sm:$0x3] %vm988, %v986
        %991 = vrot.lane.b32.xlu0 %v899, 96
        %v992 = vpop.permute.xlu0 %991
        %994 = vst.msk [vmem:[#allocation4] sm:$0x3] %vm988, %v992
        %996 = vrot.lane.b32.xlu0 %v961, 32
        %v997 = vpop.permute.xlu0 %996
        %999 = vst.msk [vmem:[#allocation5] sm:$0x3] %vm988, %v997
        %1001 = vrot.lane.b32.xlu0 %v955, 96
        %v1002 = vpop.permute.xlu0 %1001
        %1004 = vst.msk [vmem:[#allocation6] sm:$0x3] %vm988, %v1002
        %s1005 = smul.u32 4, %s27
        %p1006 = scmp.lt.s32.totalorder %s1005, 7
        %s1007 = scalar_select %p1006, %s1005, 7
        %p1008 = scmp.lt.s32.totalorder %s26, 0
        %s1009 = scalar_select %p1008, %s26, 0
        %s1010 = sadd.s32 %s1009, %s1007
        %s1011 = smul.addr %s1010, 2
        %s1012 = scalar_lea.vmem %s9, %s1011
        // Predicated region
        $region73: #{lstm_decoder_forward.1} parent=55 // pred_check
          %p1013 = pneg %p248
        $region74: #{lstm_decoder_forward.1} parent=55 // pred_check_branch
          %1015 = sbr.rel (%p1013) target = $region76
        $region75: #{lstm_decoder_forward.1} parent=55 // pred_region
          %s1016 = smul.u32 4, %s27
        $region76: #{lstm_decoder_forward.1} parent=55 // pred_fallthru
          _
      $region56: #{lstm_decoder_forward.1} parent=5 // pred_fallthru
        _
      %p1017 = scmp.le.s32.totalorder 2, %s17
      // Predicated region
      $region77: #{lstm_decoder_forward.1} parent=5 // pred_check
        %p1018 = pneg %p1017
      $region78: #{lstm_decoder_forward.1} parent=5 // pred_check_branch
        %1020 = sbr.rel (%p1018) target = $region80
      $region79: #{lstm_decoder_forward.1} parent=5 // pred_region
        %s1021 = ssub.s32 %s17, 2
        // Predicated region
        $region81: #{lstm_decoder_forward.1} parent=79 // pred_check
          %p1022 = pneg %p254
        $region82: #{lstm_decoder_forward.1} parent=79 // pred_check_branch
          %1024 = sbr.rel (%p1022) target = $region84
        $region83: #{lstm_decoder_forward.1} parent=79 // pred_region
          %s1025 = smul.u32 4, %s29
          %p1026 = scmp.lt.s32.totalorder %s1025, 7
          %s1027 = scalar_select %p1026, %s1025, 7
          %p1028 = scmp.lt.s32.totalorder %s28, 0
          %s1029 = scalar_select %p1028, %s28, 0
          %s1030 = sadd.s32 %s1029, %s1027
          %s1031 = smul.addr %s1030, 2
          %s1032 = scalar_lea.vmem %s9, %s1031
        $region84: #{lstm_decoder_forward.1} parent=79 // pred_fallthru
          _
      $region80: #{lstm_decoder_forward.1} parent=5 // pred_fallthru
        _
    $region6: #{lstm_decoder_forward.1} parent=1 // loop_footer
      %s21 = sadd.s32 1, %s17
    $region7: #{lstm_decoder_forward.1} parent=1 // loop_footer_branch
      %16 = sbr.rel target = $region3
    $region8: #{lstm_decoder_forward.1} parent=1 // loop_exit
      _
    %1033 = vsyncpa [#allocation8], 1
    %s1034 = scalar_lea.sflag [#allocation8], 1
    %1035 = vsyncpa %s1034, 1
    %1036 = vsyncpa [#allocation10], 1

</llo_original>
